<compile_context>
chip_gen: v6e
topology: v6e:2x2x1
jax: 0.10.0
libtpu: 0.0.40
codegen_flags: <defaults>
</compile_context>

<pallas_src>
import functools
import math

import jax
import jax.numpy as jnp
from jax.experimental import pallas as pl
from jax.experimental.pallas import tpu as pltpu


# ----------------------------------------------------------------------------- #
# Per-generation VMEM budget & tiling helpers
# ----------------------------------------------------------------------------- #
def _detect_vmem_limit():
    """~75% of physical VMEM (96 MiB on v5e/v6e, 48 MiB on v7x); safe fallback."""
    try:
        info = pltpu.get_tpu_info()
        cap = getattr(info, "vmem_capacity_bytes", None)
        if cap:
            return int(cap) * 3 // 4
    except Exception:
        pass
    return 48 * 1024 * 1024  # conservative: fits v7x's 64 MiB physical VMEM


_VMEM_LIMIT = _detect_vmem_limit()

# Candidate row tiles: powers of two only (256-wide MXU friendly; no 384).
_ROW_TILE_CANDIDATES = (1024, 512, 256, 128, 64, 32, 16, 8)


def _f32_slab_budget():
    # The in-kernel f32 intermediate (tm x N x 4B) is the hidden VMEM driver.
    return max(4 * 1024 * 1024, _VMEM_LIMIT // 4)


def _row_tile(M, N):
    """Return (tile, row_padding).  Largest candidate whose f32 epilogue slab fits the
    per-generation budget; pad M (instead of one giant block) when no divisor exists."""
    budget = _f32_slab_budget()
    m8 = max(8, ((M + 7) // 8) * 8)
    cands = [t for t in _ROW_TILE_CANDIDATES if t * N * 4 <= budget and t <= m8]
    if not cands:
        cands = [8]
    t = cands[0]
    if M % t == 0:
        return t, 0
    for t2 in cands:                      # prefer an exact divisor >= t/2 over padding
        if t2 * 2 >= t and M % t2 == 0:
            return t2, 0
    return t, (-M) % t


def _compiler_params(semantics=("parallel",)):
    return pltpu.CompilerParams(dimension_semantics=semantics,
                                vmem_limit_bytes=_VMEM_LIMIT)


# --- single-buffering of grid-invariant operands (probed once, safe fallback) --- #
_SINGLE_BUFFER_OK = None


def _single_buffer_supported():
    global _SINGLE_BUFFER_OK
    if _SINGLE_BUFFER_OK is None:
        try:
            def _k(a_ref, o_ref):
                o_ref[...] = a_ref[...] + 1.0
            x = jnp.zeros((8, 128), jnp.float32)
            y = pl.pallas_call(
                _k,
                out_shape=jax.ShapeDtypeStruct((8, 128), jnp.float32),
                grid=(2,),
                in_specs=[pl.BlockSpec((8, 128), lambda i: (0, 0),
                                       pipeline_mode=pl.Buffered(1))],
                out_specs=pl.BlockSpec((8, 128), lambda i: (0, 0)),
            )(x)
            _SINGLE_BUFFER_OK = bool(jnp.all(y == 1.0))
        except Exception:
            _SINGLE_BUFFER_OK = False
    return _SINGLE_BUFFER_OK


def _const_spec(shape):
    """BlockSpec for a grid-invariant operand: fetched once; single-buffered if supported."""
    index_map = lambda i: (0,) * len(shape)
    if _single_buffer_supported():
        return pl.BlockSpec(shape, index_map, pipeline_mode=pl.Buffered(1))
    return pl.BlockSpec(shape, index_map)


# ----------------------------------------------------------------------------- #
# Pallas kernels
# ----------------------------------------------------------------------------- #
def _make_linear_kernel(activation):
    """x @ w + b (optionally fused gelu) on the MXU; f32 epilogue math."""
    def kernel(x_ref, w_ref, b_ref, o_ref):
        y = jnp.dot(x_ref[...], w_ref[...], preferred_element_type=jnp.float32)
        y = y + b_ref[...]                        # bias kept f32
        if activation == "gelu":
            # TODO(synk): HF BERT uses exact erf-GELU; tanh approximation used here.
            y = jax.nn.gelu(y, approximate=True)
        o_ref[...] = y.astype(o_ref.dtype)
    return kernel


def linear(x, w, b, activation=None, out_dtype=jnp.bfloat16):
    """x: [M, K] bf16, w: [K, N] bf16, b: [N] f32 -> [M, N] out_dtype."""
    M, K = x.shape
    N = w.shape[1]
    tm, pad = _row_tile(M, N)
    if pad:
        x = jnp.pad(x, ((0, pad), (0, 0)))
    Mp = M + pad
    out = pl.pallas_call(
        _make_linear_kernel(activation),
        out_shape=jax.ShapeDtypeStruct((Mp, N), out_dtype),
        grid=(Mp // tm,),
        in_specs=[
            pl.BlockSpec((tm, K), lambda i: (i, 0)),
            _const_spec((K, N)),                 # weight resident, single-buffered
            _const_spec((1, N)),
        ],
        out_specs=pl.BlockSpec((tm, N), lambda i: (i, 0)),
        compiler_params=_compiler_params(),
    )(x, w, b.reshape(1, N).astype(jnp.float32))
    return out[:M] if pad else out


def _linear_res_ln_kernel(x_ref, w_ref, b_ref, r_ref, g_ref, bb_ref, o_ref, *, eps):
    """(x @ w + b + residual) -> LayerNorm, fused epilogue, f32 math."""
    y = jnp.dot(x_ref[...], w_ref[...], preferred_element_type=jnp.float32)
    y = y + b_ref[...] + r_ref[...].astype(jnp.float32)
    mu = jnp.mean(y, axis=-1, keepdims=True)
    var = jnp.mean(jnp.square(y - mu), axis=-1, keepdims=True)
    y = (y - mu) * jax.lax.rsqrt(var + eps)
    o_ref[...] = (y * g_ref[...] + bb_ref[...]).astype(o_ref.dtype)


def linear_residual_layernorm(x, w, b, residual, gamma, beta, eps=1e-12,
                              out_dtype=jnp.bfloat16):
    """LayerNorm(residual + x @ w + b).  x: [M, K], residual: [M, N]."""
    M, K = x.shape
    N = w.shape[1]
    tm, pad = _row_tile(M, N)
    if pad:
        x = jnp.pad(x, ((0, pad), (0, 0)))
        residual = jnp.pad(residual, ((0, pad), (0, 0)))
    Mp = M + pad
    out = pl.pallas_call(
        functools.partial(_linear_res_ln_kernel, eps=eps),
        out_shape=jax.ShapeDtypeStruct((Mp, N), out_dtype),
        grid=(Mp // tm,),
        in_specs=[
            pl.BlockSpec((tm, K), lambda i: (i, 0)),
            _const_spec((K, N)),
            _const_spec((1, N)),
            pl.BlockSpec((tm, N), lambda i: (i, 0)),
            _const_spec((1, N)),
            _const_spec((1, N)),
        ],
        out_specs=pl.BlockSpec((tm, N), lambda i: (i, 0)),
        compiler_params=_compiler_params(),
    )(x, w, b.reshape(1, N).astype(jnp.float32), residual,
      gamma.reshape(1, N).astype(jnp.float32),
      beta.reshape(1, N).astype(jnp.float32))
    return out[:M] if pad else out


def _layernorm_kernel(x_ref, g_ref, b_ref, o_ref, *, eps):
    x = x_ref[...].astype(jnp.float32)
    mu = jnp.mean(x, axis=-1, keepdims=True)
    var = jnp.mean(jnp.square(x - mu), axis=-1, keepdims=True)
    y = (x - mu) * jax.lax.rsqrt(var + eps)
    o_ref[...] = (y * g_ref[...] + b_ref[...]).astype(o_ref.dtype)


def layer_norm(x, gamma, beta, eps=1e-12, out_dtype=jnp.bfloat16):
    """x: [M, H] -> [M, H] out_dtype (reduce over last axis, f32 stats)."""
    M, H = x.shape
    tm, pad = _row_tile(M, H)
    if pad:
        x = jnp.pad(x, ((0, pad), (0, 0)))
    Mp = M + pad
    out = pl.pallas_call(
        functools.partial(_layernorm_kernel, eps=eps),
        out_shape=jax.ShapeDtypeStruct((Mp, H), out_dtype),
        grid=(Mp // tm,),
        in_specs=[
            pl.BlockSpec((tm, H), lambda i: (i, 0)),
            _const_spec((1, H)),
            _const_spec((1, H)),
        ],
        out_specs=pl.BlockSpec((tm, H), lambda i: (i, 0)),
        compiler_params=_compiler_params(),
    )(x, gamma.reshape(1, H).astype(jnp.float32),
      beta.reshape(1, H).astype(jnp.float32))
    return out[:M] if pad else out


def _attention_kernel(qkv_ref, m_ref, o_ref, *, nH, Dh, tq, n_q, scale):
    """All heads for one (batch, query-tile); K/V resident for the full sequence."""
    H = nH * Dh
    full = qkv_ref[0]                     # (S, 3H) bf16 — K/V for the whole sequence
    mask = m_ref[0]                       # (1, S) f32 additive (-1e9 on padding)
    if n_q == 1:
        q_tile = full                     # query tile == full block (static path)
    else:
        q_start = pl.multiple_of(pl.program_id(1) * tq, tq)
        q_tile = qkv_ref[0, pl.ds(q_start, tq), :]          # (tq, 3H)
    for h in range(nH):                   # static unroll over heads
        # TODO(synk): Dh-wide (<128-lane) head slices may lower to masked loads; a
        # head-major QKV column layout would make each slice 128-lane aligned.
        q = q_tile[:, h * Dh:(h + 1) * Dh] * scale           # scale folded into Q (tq x Dh)
        k = full[:, H + h * Dh:H + (h + 1) * Dh]
        v = full[:, 2 * H + h * Dh:2 * H + (h + 1) * Dh]
        # Contract last axes directly (no XLU transpose of K).
        s = jax.lax.dot_general(q, k, (((1,), (1,)), ((), ())),
                                preferred_element_type=jnp.float32)
        s = s + mask                                         # broadcast over query rows
        s = s - jnp.max(s, axis=-1, keepdims=True)
        p = jnp.exp(s)                                       # f32 softmax
        inv = pl.reciprocal(jnp.sum(p, axis=-1, keepdims=True), approx=True)
        ctx = jnp.dot(p.astype(full.dtype), v,
                      preferred_element_type=jnp.float32) * inv        # (tq, Dh)
        # Retire this head immediately (no concatenate keeping all heads live).
        o_ref[0, :, h * Dh:(h + 1) * Dh] = ctx.astype(o_ref.dtype)


def attention(qkv, mask_bias, nH):
    """qkv: [B, S, 3H] bf16, mask_bias: [B, 1, S] f32 -> [B, S, H] bf16."""
    B, S, H3 = qkv.shape
    H = H3 // 3
    Dh = H // nH
    scale = 1.0 / math.sqrt(Dh)
    # Query-row tiling: extra parallel axis (both v7x cores busy, bounded f32 score slab).
    if S <= 256:
        tq = S
    else:
        tq = next((t for t in (256, 128, 64, 32, 16, 8) if S % t == 0), S)
    n_q = S // tq
    return pl.pallas_call(
        functools.partial(_attention_kernel, nH=nH, Dh=Dh, tq=tq, n_q=n_q, scale=scale),
        out_shape=jax.ShapeDtypeStruct((B, S, H), jnp.bfloat16),
        grid=(B, n_q),
        in_specs=[
            pl.BlockSpec((1, S, H3), lambda b, qi: (b, 0, 0)),   # fetched once per batch elem
            pl.BlockSpec((1, 1, S), lambda b, qi: (b, 0, 0)),    # per-batch mask, no head copies
        ],
        out_specs=pl.BlockSpec((1, tq, H), lambda b, qi: (b, qi, 0)),
        compiler_params=_compiler_params(("parallel", "parallel")),
    )(qkv, mask_bias)


def _pooler_classifier_kernel(cls_ref, pw_ref, pb_ref, cw_ref, cb_ref, o_ref):
    pooled = jnp.tanh(
        jnp.dot(cls_ref[...], pw_ref[...], preferred_element_type=jnp.float32)
        + pb_ref[...])
    # nn.Dropout(0.15) is identity in eval/inference mode.
    # TODO(synk): training-mode stochastic dropout omitted (inference semantics).
    # Classifier output dim is 1 (degenerate MXU shape) -> VPU row-reduction instead.
    logits = jnp.sum(pooled * cw_ref[...].astype(jnp.float32),
                     axis=-1, keepdims=True) + cb_ref[...]
    o_ref[...] = logits.astype(o_ref.dtype)


def pooler_classifier(cls_tok, pool_w, pool_b, cls_w, cls_b):
    """Fused BERT pooler (tanh) + dropout(eval) + Linear(H, 1) in one tiny kernel."""
    B, H = cls_tok.shape
    return pl.pallas_call(
        _pooler_classifier_kernel,
        out_shape=jax.ShapeDtypeStruct((B, 1), jnp.float32),
        grid=(1,),
        in_specs=[
            pl.BlockSpec((B, H), lambda i: (0, 0)),
            pl.BlockSpec((H, H), lambda i: (0, 0)),
            pl.BlockSpec((1, H), lambda i: (0, 0)),
            pl.BlockSpec((1, H), lambda i: (0, 0)),
            pl.BlockSpec((1, 1), lambda i: (0, 0)),
        ],
        out_specs=pl.BlockSpec((B, 1), lambda i: (0, 0)),
        compiler_params=_compiler_params(("arbitrary",)),
    )(cls_tok, pool_w, pool_b.reshape(1, H).astype(jnp.float32),
      cls_w.reshape(1, H), cls_b.reshape(1, 1).astype(jnp.float32))


# ----------------------------------------------------------------------------- #
# Parameter init (deterministic, synthetic — mirrors HF BERT init, std=0.02)
# Weights & embedding tables stored bf16 ONCE; biases / LN params stay f32.
# ----------------------------------------------------------------------------- #
def init_params(key, cfg):
    H, I, nL = cfg["hidden"], cfg["intermediate"], cfg["layers"]
    V, P, T = cfg["vocab"], cfg["max_pos"], cfg["type_vocab"]

    def nrm(k, shape):
        return (0.02 * jax.random.normal(k, shape, dtype=jnp.float32)).astype(jnp.bfloat16)

    keys = iter(jax.random.split(key, 8 + nL * 8))
    params = {
        "word_emb": nrm(next(keys), (V, H)),
        "pos_emb": nrm(next(keys), (P, H)),
        "type_emb": nrm(next(keys), (T, H)),
        "emb_ln_g": jnp.ones((H,), jnp.float32),
        "emb_ln_b": jnp.zeros((H,), jnp.float32),
        "pool_w": nrm(next(keys), (H, H)),
        "pool_b": jnp.zeros((H,), jnp.float32),
        "cls_w": nrm(next(keys), (H, 1)),
        "cls_b": jnp.zeros((1,), jnp.float32),
        "layers": [],
    }
    for _ in range(nL):
        params["layers"].append({
            # Q/K/V fused into one [H, 3H] projection (single MXU pass per layer).
            "qkv_w": jnp.concatenate(
                [nrm(next(keys), (H, H)) for _ in range(3)], axis=1),
            "qkv_b": jnp.zeros((3 * H,), jnp.float32),
            "o_w": nrm(next(keys), (H, H)), "o_b": jnp.zeros((H,), jnp.float32),
            "attn_ln_g": jnp.ones((H,), jnp.float32),
            "attn_ln_b": jnp.zeros((H,), jnp.float32),
            "ffn_w1": nrm(next(keys), (H, I)), "ffn_b1": jnp.zeros((I,), jnp.float32),
            "ffn_w2": nrm(next(keys), (I, H)), "ffn_b2": jnp.zeros((H,), jnp.float32),
            "ffn_ln_g": jnp.ones((H,), jnp.float32),
            "ffn_ln_b": jnp.zeros((H,), jnp.float32),
        })
    return params


# ----------------------------------------------------------------------------- #
# BertRanker forward
# ----------------------------------------------------------------------------- #
def bert_ranker_forward(params, input_ids, attention_mask, token_type_ids, cfg):
    B, S = input_ids.shape
    H, nH = cfg["hidden"], cfg["heads"]
    M = B * S

    # --- embeddings: bf16 tables -> bf16 gathers + add (XLA glue, fused under jit),
    #     then one Pallas LayerNorm pass (f32 stats in-kernel).
    pos_ids = jnp.arange(S, dtype=jnp.int32)[None, :]
    emb = (params["word_emb"][input_ids]
           + params["pos_emb"][pos_ids]
           + params["type_emb"][token_type_ids])                       # [B,S,H] bf16
    x = layer_norm(emb.reshape(M, H), params["emb_ln_g"], params["emb_ln_b"])

    # additive attention mask: 0 where attended, -1e9 where padded (per batch only)
    mask_bias = ((1.0 - attention_mask.astype(jnp.float32)) * -1e9).reshape(B, 1, S)

    for layer in params["layers"]:
        # --- self-attention ----------------------------------------------------
        qkv = linear(x, layer["qkv_w"], layer["qkv_b"])                # [M, 3H] bf16
        ctx = attention(qkv.reshape(B, S, 3 * H), mask_bias, nH)       # [B, S, H] bf16
        x = linear_residual_layernorm(
            ctx.reshape(M, H), layer["o_w"], layer["o_b"],
            x, layer["attn_ln_g"], layer["attn_ln_b"])                 # [M, H] bf16
        # --- feed-forward -------------------------------------------------------
        h = linear(x, layer["ffn_w1"], layer["ffn_b1"],
                   activation="gelu")                                  # [M, I] bf16
        x = linear_residual_layernorm(
            h, layer["ffn_w2"], layer["ffn_b2"],
            x, layer["ffn_ln_g"], layer["ffn_ln_b"])                   # [M, H] bf16

    cls_tok = x.reshape(B, S, H)[:, 0, :]                              # [B, H] bf16
    logits = pooler_classifier(cls_tok, params["pool_w"], params["pool_b"],
                               params["cls_w"], params["cls_b"])
    return logits                                                      # [B, 1] f32


# ----------------------------------------------------------------------------- #
if __name__ == "__main__":
    cfg = dict(hidden=32, heads=2, layers=2, intermediate=64,
               vocab=128, max_pos=16, type_vocab=2)
    B, S = 2, 8

    key = jax.random.PRNGKey(0)
    k_params, k_ids, k_types = jax.random.split(key, 3)

    params = init_params(k_params, cfg)
    input_ids = jax.random.randint(k_ids, (B, S), 0, cfg["vocab"], dtype=jnp.int32)
    token_type_ids = jax.random.randint(k_types, (B, S), 0, cfg["type_vocab"],
                                        dtype=jnp.int32)
    # second sequence has two padding positions at the end
    attention_mask = jnp.array([[1, 1, 1, 1, 1, 1, 1, 1],
                                [1, 1, 1, 1, 1, 1, 0, 0]], dtype=jnp.int32)

    _single_buffer_supported()   # resolve the Buffered(1) probe outside the jit trace

    fwd = jax.jit(lambda p, ii, am, tt: bert_ranker_forward(p, ii, am, tt, cfg))
    logits = fwd(params, input_ids, attention_mask, token_type_ids)
    jax.block_until_ready(logits)
    assert logits.shape == (B, 1) and logits.dtype == jnp.float32
    print("KERNEL_OK")
</pallas_src>

<mosaic_0001>
module attributes {stable_mosaic.version = 11 : i64} {
  func.func @_k(%arg0: i32, %arg1: memref<8x128xf32, #tpu.memory_space<vmem>>, %arg2: memref<8x128xf32, #tpu.memory_space<vmem>>) attributes {dimension_semantics = [#tpu.dimension_semantics<arbitrary>], iteration_bounds = array<i64: 2>, scalar_prefetch = 0 : i64, scratch_operands = 0 : i64, tpu.core_type = #tpu.core_type<tc>, window_params = [{pipeline_mode = #tpu.pipeline_mode<synchronous>, transform_indices = @transform_0, window_bounds = array<i64: 8, 128>}, {pipeline_mode = #tpu.pipeline_mode<synchronous>, transform_indices = @transform_1, window_bounds = array<i64: 8, 128>}]} {
    %c0 = arith.constant 0 : index
    %c0_0 = arith.constant 0 : index
    %0 = vector.load %arg1[%c0, %c0_0] : memref<8x128xf32, #tpu.memory_space<vmem>>, vector<8x128xf32>
    %cst = arith.constant 1.000000e+00 : f32
    %1 = vector.broadcast %cst : f32 to vector<8x128xf32>
    %2 = arith.addf %0, %1 : vector<8x128xf32>
    %c0_1 = arith.constant 0 : index
    %c0_2 = arith.constant 0 : index
    %3 = vector.load %arg2[%c0_1, %c0_2] : memref<8x128xf32, #tpu.memory_space<vmem>>, vector<8x128xf32>
    tpu.vector_store %arg2[%c0_1, %c0_2], %2 {strides = array<i32>} : memref<8x128xf32, #tpu.memory_space<vmem>>, vector<8x128xf32>,
    return
  }
  func.func @transform_0(%arg0: i32) -> (i32, i32) {
    %c0_i32 = arith.constant 0 : i32
    %c0_i32_0 = arith.constant 0 : i32
    %c0_i32_1 = arith.constant 0 : i32
    return %c0_i32, %c0_i32_0 : i32, i32
  }
  func.func @transform_1(%arg0: i32) -> (i32, i32) {
    %c0_i32 = arith.constant 0 : i32
    %c0_i32_0 = arith.constant 0 : i32
    %c0_i32_1 = arith.constant 0 : i32
    return %c0_i32, %c0_i32_0 : i32, i32
  }
}

module attributes {stable_mosaic.version = 11 : i64} {
  func.func @_layernorm_kernel(%arg0: i32, %arg1: memref<16x32xbf16, #tpu.memory_space<vmem>>, %arg2: memref<1x32xf32, #tpu.memory_space<vmem>>, %arg3: memref<1x32xf32, #tpu.memory_space<vmem>>, %arg4: memref<16x32xbf16, #tpu.memory_space<vmem>>) attributes {dimension_semantics = [#tpu.dimension_semantics<parallel>], iteration_bounds = array<i64: 1>, scalar_prefetch = 0 : i64, scratch_operands = 0 : i64, tpu.core_type = #tpu.core_type<tc>, window_params = [{transform_indices = @transform_0, window_bounds = array<i64: 16, 32>}, {pipeline_mode = #tpu.pipeline_mode<synchronous>, transform_indices = @transform_1, window_bounds = array<i64: 1, 32>}, {pipeline_mode = #tpu.pipeline_mode<synchronous>, transform_indices = @transform_2, window_bounds = array<i64: 1, 32>}, {transform_indices = @transform_3, window_bounds = array<i64: 16, 32>}]} {
    %c0 = arith.constant 0 : index
    %c0_0 = arith.constant 0 : index
    %0 = vector.load %arg1[%c0, %c0_0] : memref<16x32xbf16, #tpu.memory_space<vmem>>, vector<16x32xbf16>
    %1 = arith.extf %0 : vector<16x32xbf16> to vector<16x32xf32>
    %cst = arith.constant dense<0.000000e+00> : vector<16xf32>
    %2 = vector.multi_reduction <add>, %1, %cst [1] : vector<16x32xf32> to vector<16xf32>
    %3 = vector.shape_cast %2 : vector<16xf32> to vector<16x1xf32>
    %cst_1 = arith.constant 3.200000e+01 : f32
    %4 = vector.broadcast %cst_1 : f32 to vector<16x1xf32>
    %5 = arith.divf %3, %4 : vector<16x1xf32>
    %6 = vector.broadcast %5 : vector<16x1xf32> to vector<16x32xf32>
    %7 = arith.subf %1, %6 : vector<16x32xf32>
    %8 = arith.mulf %7, %7 : vector<16x32xf32>
    %cst_2 = arith.constant dense<0.000000e+00> : vector<16xf32>
    %9 = vector.multi_reduction <add>, %8, %cst_2 [1] : vector<16x32xf32> to vector<16xf32>
    %10 = vector.shape_cast %9 : vector<16xf32> to vector<16x1xf32>
    %cst_3 = arith.constant 3.200000e+01 : f32
    %11 = vector.broadcast %cst_3 : f32 to vector<16x1xf32>
    %12 = arith.divf %10, %11 : vector<16x1xf32>
    %13 = vector.broadcast %5 : vector<16x1xf32> to vector<16x32xf32>
    %14 = arith.subf %1, %13 : vector<16x32xf32>
    %cst_4 = arith.constant 9.99999996E-13 : f32
    %15 = vector.broadcast %cst_4 : f32 to vector<16x1xf32>
    %16 = arith.addf %12, %15 : vector<16x1xf32>
    %17 = math.rsqrt %16 : vector<16x1xf32>
    %18 = vector.broadcast %17 : vector<16x1xf32> to vector<16x32xf32>
    %19 = arith.mulf %14, %18 : vector<16x32xf32>
    %c0_5 = arith.constant 0 : index
    %c0_6 = arith.constant 0 : index
    %20 = vector.load %arg2[%c0_5, %c0_6] : memref<1x32xf32, #tpu.memory_space<vmem>>, vector<1x32xf32>
    %21 = vector.broadcast %20 : vector<1x32xf32> to vector<16x32xf32>
    %22 = arith.mulf %19, %21 : vector<16x32xf32>
    %c0_7 = arith.constant 0 : index
    %c0_8 = arith.constant 0 : index
    %23 = vector.load %arg3[%c0_7, %c0_8] : memref<1x32xf32, #tpu.memory_space<vmem>>, vector<1x32xf32>
    %24 = vector.broadcast %23 : vector<1x32xf32> to vector<16x32xf32>
    %25 = arith.addf %22, %24 : vector<16x32xf32>
    %26 = arith.truncf %25 : vector<16x32xf32> to vector<16x32xbf16>
    %c0_9 = arith.constant 0 : index
    %c0_10 = arith.constant 0 : index
    %27 = vector.load %arg4[%c0_9, %c0_10] : memref<16x32xbf16, #tpu.memory_space<vmem>>, vector<16x32xbf16>
    tpu.vector_store %arg4[%c0_9, %c0_10], %26 {strides = array<i32>} : memref<16x32xbf16, #tpu.memory_space<vmem>>, vector<16x32xbf16>,
    return
  }
  func.func @transform_0(%arg0: i32) -> (i32, i32) {
    %c0_i32 = arith.constant 0 : i32
    %c0_i32_0 = arith.constant 0 : i32
    return %arg0, %c0_i32 : i32, i32
  }
  func.func @transform_1(%arg0: i32) -> (i32, i32) {
    %c0_i32 = arith.constant 0 : i32
    %c0_i32_0 = arith.constant 0 : i32
    %c0_i32_1 = arith.constant 0 : i32
    return %c0_i32, %c0_i32_0 : i32, i32
  }
  func.func @transform_2(%arg0: i32) -> (i32, i32) {
    %c0_i32 = arith.constant 0 : i32
    %c0_i32_0 = arith.constant 0 : i32
    %c0_i32_1 = arith.constant 0 : i32
    return %c0_i32, %c0_i32_0 : i32, i32
  }
  func.func @transform_3(%arg0: i32) -> (i32, i32) {
    %c0_i32 = arith.constant 0 : i32
    %c0_i32_0 = arith.constant 0 : i32
    return %arg0, %c0_i32 : i32, i32
  }
}

module attributes {stable_mosaic.version = 11 : i64} {
  func.func @kernel(%arg0: i32, %arg1: memref<16x32xbf16, #tpu.memory_space<vmem>>, %arg2: memref<32x96xbf16, #tpu.memory_space<vmem>>, %arg3: memref<1x96xf32, #tpu.memory_space<vmem>>, %arg4: memref<16x96xbf16, #tpu.memory_space<vmem>>) attributes {dimension_semantics = [#tpu.dimension_semantics<parallel>], iteration_bounds = array<i64: 1>, scalar_prefetch = 0 : i64, scratch_operands = 0 : i64, tpu.core_type = #tpu.core_type<tc>, window_params = [{transform_indices = @transform_0, window_bounds = array<i64: 16, 32>}, {pipeline_mode = #tpu.pipeline_mode<synchronous>, transform_indices = @transform_1, window_bounds = array<i64: 32, 96>}, {pipeline_mode = #tpu.pipeline_mode<synchronous>, transform_indices = @transform_2, window_bounds = array<i64: 1, 96>}, {transform_indices = @transform_3, window_bounds = array<i64: 16, 96>}]} {
    %c0 = arith.constant 0 : index
    %c0_0 = arith.constant 0 : index
    %0 = vector.load %arg1[%c0, %c0_0] : memref<16x32xbf16, #tpu.memory_space<vmem>>, vector<16x32xbf16>
    %c0_1 = arith.constant 0 : index
    %c0_2 = arith.constant 0 : index
    %1 = vector.load %arg2[%c0_1, %c0_2] : memref<32x96xbf16, #tpu.memory_space<vmem>>, vector<32x96xbf16>
    %cst = arith.constant dense<0.000000e+00> : vector<16x96xf32>
    %2 = tpu.matmul %0, %1, %cst {dimension_numbers = #tpu.dot_dimension_numbers<[1], [0], [0], [1], [0, 0, 1, 1], [], []>} : vector<16x32xbf16>, vector<32x96xbf16>, vector<16x96xf32> -> vector<16x96xf32>
    %c0_3 = arith.constant 0 : index
    %c0_4 = arith.constant 0 : index
    %3 = vector.load %arg3[%c0_3, %c0_4] : memref<1x96xf32, #tpu.memory_space<vmem>>, vector<1x96xf32>
    %4 = vector.broadcast %3 : vector<1x96xf32> to vector<16x96xf32>
    %5 = arith.addf %2, %4 : vector<16x96xf32>
    %6 = arith.truncf %5 : vector<16x96xf32> to vector<16x96xbf16>
    %c0_5 = arith.constant 0 : index
    %c0_6 = arith.constant 0 : index
    %7 = vector.load %arg4[%c0_5, %c0_6] : memref<16x96xbf16, #tpu.memory_space<vmem>>, vector<16x96xbf16>
    tpu.vector_store %arg4[%c0_5, %c0_6], %6 {strides = array<i32>} : memref<16x96xbf16, #tpu.memory_space<vmem>>, vector<16x96xbf16>,
    return
  }
  func.func @transform_0(%arg0: i32) -> (i32, i32) {
    %c0_i32 = arith.constant 0 : i32
    %c0_i32_0 = arith.constant 0 : i32
    return %arg0, %c0_i32 : i32, i32
  }
  func.func @transform_1(%arg0: i32) -> (i32, i32) {
    %c0_i32 = arith.constant 0 : i32
    %c0_i32_0 = arith.constant 0 : i32
    %c0_i32_1 = arith.constant 0 : i32
    return %c0_i32, %c0_i32_0 : i32, i32
  }
  func.func @transform_2(%arg0: i32) -> (i32, i32) {
    %c0_i32 = arith.constant 0 : i32
    %c0_i32_0 = arith.constant 0 : i32
    %c0_i32_1 = arith.constant 0 : i32
    return %c0_i32, %c0_i32_0 : i32, i32
  }
  func.func @transform_3(%arg0: i32) -> (i32, i32) {
    %c0_i32 = arith.constant 0 : i32
    %c0_i32_0 = arith.constant 0 : i32
    return %arg0, %c0_i32 : i32, i32
  }
}

module attributes {stable_mosaic.version = 11 : i64} {
  func.func @_attention_kernel(%arg0: i32, %arg1: i32, %arg2: memref<1x8x96xbf16, #tpu.memory_space<vmem>>, %arg3: memref<1x1x8xf32, #tpu.memory_space<vmem>>, %arg4: memref<1x8x32xbf16, #tpu.memory_space<vmem>>) attributes {dimension_semantics = [#tpu.dimension_semantics<parallel>, #tpu.dimension_semantics<parallel>], iteration_bounds = array<i64: 2, 1>, scalar_prefetch = 0 : i64, scratch_operands = 0 : i64, tpu.core_type = #tpu.core_type<tc>, window_params = [{transform_indices = @transform_0, window_bounds = array<i64: 1, 8, 96>}, {transform_indices = @transform_1, window_bounds = array<i64: 1, 1, 8>}, {transform_indices = @transform_2, window_bounds = array<i64: 1, 8, 32>}]} {
    %c0 = arith.constant 0 : index
    %c0_0 = arith.constant 0 : index
    %c0_1 = arith.constant 0 : index
    %0 = vector.load %arg2[%c0, %c0_0, %c0_1] : memref<1x8x96xbf16, #tpu.memory_space<vmem>>, vector<1x8x96xbf16>
    %1 = vector.shape_cast %0 : vector<1x8x96xbf16> to vector<8x96xbf16>
    %c0_2 = arith.constant 0 : index
    %c0_3 = arith.constant 0 : index
    %c0_4 = arith.constant 0 : index
    %2 = vector.load %arg3[%c0_2, %c0_3, %c0_4] : memref<1x1x8xf32, #tpu.memory_space<vmem>>, vector<1x1x8xf32>
    %3 = vector.shape_cast %2 : vector<1x1x8xf32> to vector<1x8xf32>
    %4 = vector.extract_strided_slice %1 {offsets = [0, 0], sizes = [8, 16], strides = [1, 1]} : vector<8x96xbf16> to vector<8x16xbf16>
    %cst = arith.constant 2.500000e-01 : bf16
    %5 = vector.broadcast %cst : bf16 to vector<8x16xbf16>
    %6 = arith.mulf %4, %5 : vector<8x16xbf16>
    %7 = vector.extract_strided_slice %1 {offsets = [0, 32], sizes = [8, 16], strides = [1, 1]} : vector<8x96xbf16> to vector<8x16xbf16>
    %8 = vector.extract_strided_slice %1 {offsets = [0, 64], sizes = [8, 16], strides = [1, 1]} : vector<8x96xbf16> to vector<8x16xbf16>
    %cst_5 = arith.constant dense<0.000000e+00> : vector<8x8xf32>
    %9 = tpu.matmul %6, %7, %cst_5 {dimension_numbers = #tpu.dot_dimension_numbers<[1], [1], [0], [0], [0, 0, 1, 0], [], []>} : vector<8x16xbf16>, vector<8x16xbf16>, vector<8x8xf32> -> vector<8x8xf32>
    %10 = vector.broadcast %3 : vector<1x8xf32> to vector<8x8xf32>
    %11 = arith.addf %9, %10 : vector<8x8xf32>
    %cst_6 = arith.constant dense<0xFF800000> : vector<8xf32>
    %12 = vector.multi_reduction <maximumf>, %11, %cst_6 [1] : vector<8x8xf32> to vector<8xf32>
    %13 = vector.shape_cast %12 : vector<8xf32> to vector<8x1xf32>
    %14 = vector.broadcast %13 : vector<8x1xf32> to vector<8x8xf32>
    %15 = arith.subf %11, %14 : vector<8x8xf32>
    %16 = math.exp %15 : vector<8x8xf32>
    %cst_7 = arith.constant dense<0.000000e+00> : vector<8xf32>
    %17 = vector.multi_reduction <add>, %16, %cst_7 [1] : vector<8x8xf32> to vector<8xf32>
    %18 = vector.shape_cast %17 : vector<8xf32> to vector<8x1xf32>
    %19 = tpu.reciprocal %18 {approx = true} : vector<8x1xf32> -> vector<8x1xf32>
    %20 = arith.truncf %16 : vector<8x8xf32> to vector<8x8xbf16>
    %cst_8 = arith.constant dense<0.000000e+00> : vector<8x16xf32>
    %21 = tpu.matmul %20, %8, %cst_8 {dimension_numbers = #tpu.dot_dimension_numbers<[1], [0], [0], [1], [0, 0, 1, 1], [], []>} : vector<8x8xbf16>, vector<8x16xbf16>, vector<8x16xf32> -> vector<8x16xf32>
    %22 = vector.broadcast %19 : vector<8x1xf32> to vector<8x16xf32>
    %23 = arith.mulf %21, %22 : vector<8x16xf32>
    %24 = arith.truncf %23 : vector<8x16xf32> to vector<8x16xbf16>
    %c0_9 = arith.constant 0 : index
    %c0_10 = arith.constant 0 : index
    %c0_11 = arith.constant 0 : index
    %25 = vector.load %arg4[%c0_9, %c0_10, %c0_11] : memref<1x8x32xbf16, #tpu.memory_space<vmem>>, vector<1x8x16xbf16>
    %26 = vector.shape_cast %25 : vector<1x8x16xbf16> to vector<8x16xbf16>
    %27 = vector.shape_cast %24 : vector<8x16xbf16> to vector<1x8x16xbf16>
    tpu.vector_store %arg4[%c0_9, %c0_10, %c0_11], %27 {strides = array<i32>} : memref<1x8x32xbf16, #tpu.memory_space<vmem>>, vector<1x8x16xbf16>,
    %28 = vector.extract_strided_slice %1 {offsets = [0, 16], sizes = [8, 16], strides = [1, 1]} : vector<8x96xbf16> to vector<8x16xbf16>
    %cst_12 = arith.constant 2.500000e-01 : bf16
    %29 = vector.broadcast %cst_12 : bf16 to vector<8x16xbf16>
    %30 = arith.mulf %28, %29 : vector<8x16xbf16>
    %31 = vector.extract_strided_slice %1 {offsets = [0, 48], sizes = [8, 16], strides = [1, 1]} : vector<8x96xbf16> to vector<8x16xbf16>
    %32 = vector.extract_strided_slice %1 {offsets = [0, 80], sizes = [8, 16], strides = [1, 1]} : vector<8x96xbf16> to vector<8x16xbf16>
    %cst_13 = arith.constant dense<0.000000e+00> : vector<8x8xf32>
    %33 = tpu.matmul %30, %31, %cst_13 {dimension_numbers = #tpu.dot_dimension_numbers<[1], [1], [0], [0], [0, 0, 1, 0], [], []>} : vector<8x16xbf16>, vector<8x16xbf16>, vector<8x8xf32> -> vector<8x8xf32>
    %34 = vector.broadcast %3 : vector<1x8xf32> to vector<8x8xf32>
    %35 = arith.addf %33, %34 : vector<8x8xf32>
    %cst_14 = arith.constant dense<0xFF800000> : vector<8xf32>
    %36 = vector.multi_reduction <maximumf>, %35, %cst_14 [1] : vector<8x8xf32> to vector<8xf32>
    %37 = vector.shape_cast %36 : vector<8xf32> to vector<8x1xf32>
    %38 = vector.broadcast %37 : vector<8x1xf32> to vector<8x8xf32>
    %39 = arith.subf %35, %38 : vector<8x8xf32>
    %40 = math.exp %39 : vector<8x8xf32>
    %cst_15 = arith.constant dense<0.000000e+00> : vector<8xf32>
    %41 = vector.multi_reduction <add>, %40, %cst_15 [1] : vector<8x8xf32> to vector<8xf32>
    %42 = vector.shape_cast %41 : vector<8xf32> to vector<8x1xf32>
    %43 = tpu.reciprocal %42 {approx = true} : vector<8x1xf32> -> vector<8x1xf32>
    %44 = arith.truncf %40 : vector<8x8xf32> to vector<8x8xbf16>
    %cst_16 = arith.constant dense<0.000000e+00> : vector<8x16xf32>
    %45 = tpu.matmul %44, %32, %cst_16 {dimension_numbers = #tpu.dot_dimension_numbers<[1], [0], [0], [1], [0, 0, 1, 1], [], []>} : vector<8x8xbf16>, vector<8x16xbf16>, vector<8x16xf32> -> vector<8x16xf32>
    %46 = vector.broadcast %43 : vector<8x1xf32> to vector<8x16xf32>
    %47 = arith.mulf %45, %46 : vector<8x16xf32>
    %48 = arith.truncf %47 : vector<8x16xf32> to vector<8x16xbf16>
    %c0_17 = arith.constant 0 : index
    %c0_18 = arith.constant 0 : index
    %c16 = arith.constant 16 : index
    %49 = vector.load %arg4[%c0_17, %c0_18, %c16] : memref<1x8x32xbf16, #tpu.memory_space<vmem>>, vector<1x8x16xbf16>
    %50 = vector.shape_cast %49 : vector<1x8x16xbf16> to vector<8x16xbf16>
    %51 = vector.shape_cast %48 : vector<8x16xbf16> to vector<1x8x16xbf16>
    tpu.vector_store %arg4[%c0_17, %c0_18, %c16], %51 {strides = array<i32>} : memref<1x8x32xbf16, #tpu.memory_space<vmem>>, vector<1x8x16xbf16>,
    return
  }
  func.func @transform_0(%arg0: i32, %arg1: i32) -> (i32, i32, i32) {
    %c0_i32 = arith.constant 0 : i32
    %c0_i32_0 = arith.constant 0 : i32
    %c0_i32_1 = arith.constant 0 : i32
    return %arg0, %c0_i32, %c0_i32_0 : i32, i32, i32
  }
  func.func @transform_1(%arg0: i32, %arg1: i32) -> (i32, i32, i32) {
    %c0_i32 = arith.constant 0 : i32
    %c0_i32_0 = arith.constant 0 : i32
    %c0_i32_1 = arith.constant 0 : i32
    return %arg0, %c0_i32, %c0_i32_0 : i32, i32, i32
  }
  func.func @transform_2(%arg0: i32, %arg1: i32) -> (i32, i32, i32) {
    %c0_i32 = arith.constant 0 : i32
    %c0_i32_0 = arith.constant 0 : i32
    return %arg0, %arg1, %c0_i32 : i32, i32, i32
  }
}

module attributes {stable_mosaic.version = 11 : i64} {
  func.func @_linear_res_ln_kernel(%arg0: i32, %arg1: memref<16x32xbf16, #tpu.memory_space<vmem>>, %arg2: memref<32x32xbf16, #tpu.memory_space<vmem>>, %arg3: memref<1x32xf32, #tpu.memory_space<vmem>>, %arg4: memref<16x32xbf16, #tpu.memory_space<vmem>>, %arg5: memref<1x32xf32, #tpu.memory_space<vmem>>, %arg6: memref<1x32xf32, #tpu.memory_space<vmem>>, %arg7: memref<16x32xbf16, #tpu.memory_space<vmem>>) attributes {dimension_semantics = [#tpu.dimension_semantics<parallel>], iteration_bounds = array<i64: 1>, scalar_prefetch = 0 : i64, scratch_operands = 0 : i64, tpu.core_type = #tpu.core_type<tc>, window_params = [{transform_indices = @transform_0, window_bounds = array<i64: 16, 32>}, {pipeline_mode = #tpu.pipeline_mode<synchronous>, transform_indices = @transform_1, window_bounds = array<i64: 32, 32>}, {pipeline_mode = #tpu.pipeline_mode<synchronous>, transform_indices = @transform_2, window_bounds = array<i64: 1, 32>}, {transform_indices = @transform_3, window_bounds = array<i64: 16, 32>}, {pipeline_mode = #tpu.pipeline_mode<synchronous>, transform_indices = @transform_4, window_bounds = array<i64: 1, 32>}, {pipeline_mode = #tpu.pipeline_mode<synchronous>, transform_indices = @transform_5, window_bounds = array<i64: 1, 32>}, {transform_indices = @transform_6, window_bounds = array<i64: 16, 32>}]} {
    %c0 = arith.constant 0 : index
    %c0_0 = arith.constant 0 : index
    %0 = vector.load %arg1[%c0, %c0_0] : memref<16x32xbf16, #tpu.memory_space<vmem>>, vector<16x32xbf16>
    %c0_1 = arith.constant 0 : index
    %c0_2 = arith.constant 0 : index
    %1 = vector.load %arg2[%c0_1, %c0_2] : memref<32x32xbf16, #tpu.memory_space<vmem>>, vector<32x32xbf16>
    %cst = arith.constant dense<0.000000e+00> : vector<16x32xf32>
    %2 = tpu.matmul %0, %1, %cst {dimension_numbers = #tpu.dot_dimension_numbers<[1], [0], [0], [1], [0, 0, 1, 1], [], []>} : vector<16x32xbf16>, vector<32x32xbf16>, vector<16x32xf32> -> vector<16x32xf32>
    %c0_3 = arith.constant 0 : index
    %c0_4 = arith.constant 0 : index
    %3 = vector.load %arg3[%c0_3, %c0_4] : memref<1x32xf32, #tpu.memory_space<vmem>>, vector<1x32xf32>
    %4 = vector.broadcast %3 : vector<1x32xf32> to vector<16x32xf32>
    %5 = arith.addf %2, %4 : vector<16x32xf32>
    %c0_5 = arith.constant 0 : index
    %c0_6 = arith.constant 0 : index
    %6 = vector.load %arg4[%c0_5, %c0_6] : memref<16x32xbf16, #tpu.memory_space<vmem>>, vector<16x32xbf16>
    %7 = arith.extf %6 : vector<16x32xbf16> to vector<16x32xf32>
    %8 = arith.addf %5, %7 : vector<16x32xf32>
    %cst_7 = arith.constant dense<0.000000e+00> : vector<16xf32>
    %9 = vector.multi_reduction <add>, %8, %cst_7 [1] : vector<16x32xf32> to vector<16xf32>
    %10 = vector.shape_cast %9 : vector<16xf32> to vector<16x1xf32>
    %cst_8 = arith.constant 3.200000e+01 : f32
    %11 = vector.broadcast %cst_8 : f32 to vector<16x1xf32>
    %12 = arith.divf %10, %11 : vector<16x1xf32>
    %13 = vector.broadcast %12 : vector<16x1xf32> to vector<16x32xf32>
    %14 = arith.subf %8, %13 : vector<16x32xf32>
    %15 = arith.mulf %14, %14 : vector<16x32xf32>
    %cst_9 = arith.constant dense<0.000000e+00> : vector<16xf32>
    %16 = vector.multi_reduction <add>, %15, %cst_9 [1] : vector<16x32xf32> to vector<16xf32>
    %17 = vector.shape_cast %16 : vector<16xf32> to vector<16x1xf32>
    %cst_10 = arith.constant 3.200000e+01 : f32
    %18 = vector.broadcast %cst_10 : f32 to vector<16x1xf32>
    %19 = arith.divf %17, %18 : vector<16x1xf32>
    %20 = vector.broadcast %12 : vector<16x1xf32> to vector<16x32xf32>
    %21 = arith.subf %8, %20 : vector<16x32xf32>
    %cst_11 = arith.constant 9.99999996E-13 : f32
    %22 = vector.broadcast %cst_11 : f32 to vector<16x1xf32>
    %23 = arith.addf %19, %22 : vector<16x1xf32>
    %24 = math.rsqrt %23 : vector<16x1xf32>
    %25 = vector.broadcast %24 : vector<16x1xf32> to vector<16x32xf32>
    %26 = arith.mulf %21, %25 : vector<16x32xf32>
    %c0_12 = arith.constant 0 : index
    %c0_13 = arith.constant 0 : index
    %27 = vector.load %arg5[%c0_12, %c0_13] : memref<1x32xf32, #tpu.memory_space<vmem>>, vector<1x32xf32>
    %28 = vector.broadcast %27 : vector<1x32xf32> to vector<16x32xf32>
    %29 = arith.mulf %26, %28 : vector<16x32xf32>
    %c0_14 = arith.constant 0 : index
    %c0_15 = arith.constant 0 : index
    %30 = vector.load %arg6[%c0_14, %c0_15] : memref<1x32xf32, #tpu.memory_space<vmem>>, vector<1x32xf32>
    %31 = vector.broadcast %30 : vector<1x32xf32> to vector<16x32xf32>
    %32 = arith.addf %29, %31 : vector<16x32xf32>
    %33 = arith.truncf %32 : vector<16x32xf32> to vector<16x32xbf16>
    %c0_16 = arith.constant 0 : index
    %c0_17 = arith.constant 0 : index
    %34 = vector.load %arg7[%c0_16, %c0_17] : memref<16x32xbf16, #tpu.memory_space<vmem>>, vector<16x32xbf16>
    tpu.vector_store %arg7[%c0_16, %c0_17], %33 {strides = array<i32>} : memref<16x32xbf16, #tpu.memory_space<vmem>>, vector<16x32xbf16>,
    return
  }
  func.func @transform_0(%arg0: i32) -> (i32, i32) {
    %c0_i32 = arith.constant 0 : i32
    %c0_i32_0 = arith.constant 0 : i32
    return %arg0, %c0_i32 : i32, i32
  }
  func.func @transform_1(%arg0: i32) -> (i32, i32) {
    %c0_i32 = arith.constant 0 : i32
    %c0_i32_0 = arith.constant 0 : i32
    %c0_i32_1 = arith.constant 0 : i32
    return %c0_i32, %c0_i32_0 : i32, i32
  }
  func.func @transform_2(%arg0: i32) -> (i32, i32) {
    %c0_i32 = arith.constant 0 : i32
    %c0_i32_0 = arith.constant 0 : i32
    %c0_i32_1 = arith.constant 0 : i32
    return %c0_i32, %c0_i32_0 : i32, i32
  }
  func.func @transform_3(%arg0: i32) -> (i32, i32) {
    %c0_i32 = arith.constant 0 : i32
    %c0_i32_0 = arith.constant 0 : i32
    return %arg0, %c0_i32 : i32, i32
  }
  func.func @transform_4(%arg0: i32) -> (i32, i32) {
    %c0_i32 = arith.constant 0 : i32
    %c0_i32_0 = arith.constant 0 : i32
    %c0_i32_1 = arith.constant 0 : i32
    return %c0_i32, %c0_i32_0 : i32, i32
  }
  func.func @transform_5(%arg0: i32) -> (i32, i32) {
    %c0_i32 = arith.constant 0 : i32
    %c0_i32_0 = arith.constant 0 : i32
    %c0_i32_1 = arith.constant 0 : i32
    return %c0_i32, %c0_i32_0 : i32, i32
  }
  func.func @transform_6(%arg0: i32) -> (i32, i32) {
    %c0_i32 = arith.constant 0 : i32
    %c0_i32_0 = arith.constant 0 : i32
    return %arg0, %c0_i32 : i32, i32
  }
}

module attributes {stable_mosaic.version = 11 : i64} {
  func.func @kernel(%arg0: i32, %arg1: memref<16x32xbf16, #tpu.memory_space<vmem>>, %arg2: memref<32x64xbf16, #tpu.memory_space<vmem>>, %arg3: memref<1x64xf32, #tpu.memory_space<vmem>>, %arg4: memref<16x64xbf16, #tpu.memory_space<vmem>>) attributes {dimension_semantics = [#tpu.dimension_semantics<parallel>], iteration_bounds = array<i64: 1>, scalar_prefetch = 0 : i64, scratch_operands = 0 : i64, tpu.core_type = #tpu.core_type<tc>, window_params = [{transform_indices = @transform_0, window_bounds = array<i64: 16, 32>}, {pipeline_mode = #tpu.pipeline_mode<synchronous>, transform_indices = @transform_1, window_bounds = array<i64: 32, 64>}, {pipeline_mode = #tpu.pipeline_mode<synchronous>, transform_indices = @transform_2, window_bounds = array<i64: 1, 64>}, {transform_indices = @transform_3, window_bounds = array<i64: 16, 64>}]} {
    %c0 = arith.constant 0 : index
    %c0_0 = arith.constant 0 : index
    %0 = vector.load %arg1[%c0, %c0_0] : memref<16x32xbf16, #tpu.memory_space<vmem>>, vector<16x32xbf16>
    %c0_1 = arith.constant 0 : index
    %c0_2 = arith.constant 0 : index
    %1 = vector.load %arg2[%c0_1, %c0_2] : memref<32x64xbf16, #tpu.memory_space<vmem>>, vector<32x64xbf16>
    %cst = arith.constant dense<0.000000e+00> : vector<16x64xf32>
    %2 = tpu.matmul %0, %1, %cst {dimension_numbers = #tpu.dot_dimension_numbers<[1], [0], [0], [1], [0, 0, 1, 1], [], []>} : vector<16x32xbf16>, vector<32x64xbf16>, vector<16x64xf32> -> vector<16x64xf32>
    %c0_3 = arith.constant 0 : index
    %c0_4 = arith.constant 0 : index
    %3 = vector.load %arg3[%c0_3, %c0_4] : memref<1x64xf32, #tpu.memory_space<vmem>>, vector<1x64xf32>
    %4 = vector.broadcast %3 : vector<1x64xf32> to vector<16x64xf32>
    %5 = arith.addf %2, %4 : vector<16x64xf32>
    %6 = arith.mulf %5, %5 : vector<16x64xf32>
    %7 = arith.mulf %5, %6 : vector<16x64xf32>
    %cst_5 = arith.constant 4.471500e-02 : f32
    %8 = vector.broadcast %cst_5 : f32 to vector<16x64xf32>
    %9 = arith.mulf %8, %7 : vector<16x64xf32>
    %10 = arith.addf %5, %9 : vector<16x64xf32>
    %cst_6 = arith.constant 0.797884583 : f32
    %11 = vector.broadcast %cst_6 : f32 to vector<16x64xf32>
    %12 = arith.mulf %11, %10 : vector<16x64xf32>
    %13 = math.tanh %12 : vector<16x64xf32>
    %cst_7 = arith.constant 1.000000e+00 : f32
    %14 = vector.broadcast %cst_7 : f32 to vector<16x64xf32>
    %15 = arith.addf %14, %13 : vector<16x64xf32>
    %cst_8 = arith.constant 5.000000e-01 : f32
    %16 = vector.broadcast %cst_8 : f32 to vector<16x64xf32>
    %17 = arith.mulf %16, %15 : vector<16x64xf32>
    %18 = arith.mulf %5, %17 : vector<16x64xf32>
    %19 = arith.truncf %18 : vector<16x64xf32> to vector<16x64xbf16>
    %c0_9 = arith.constant 0 : index
    %c0_10 = arith.constant 0 : index
    %20 = vector.load %arg4[%c0_9, %c0_10] : memref<16x64xbf16, #tpu.memory_space<vmem>>, vector<16x64xbf16>
    tpu.vector_store %arg4[%c0_9, %c0_10], %19 {strides = array<i32>} : memref<16x64xbf16, #tpu.memory_space<vmem>>, vector<16x64xbf16>,
    return
  }
  func.func @transform_0(%arg0: i32) -> (i32, i32) {
    %c0_i32 = arith.constant 0 : i32
    %c0_i32_0 = arith.constant 0 : i32
    return %arg0, %c0_i32 : i32, i32
  }
  func.func @transform_1(%arg0: i32) -> (i32, i32) {
    %c0_i32 = arith.constant 0 : i32
    %c0_i32_0 = arith.constant 0 : i32
    %c0_i32_1 = arith.constant 0 : i32
    return %c0_i32, %c0_i32_0 : i32, i32
  }
  func.func @transform_2(%arg0: i32) -> (i32, i32) {
    %c0_i32 = arith.constant 0 : i32
    %c0_i32_0 = arith.constant 0 : i32
    %c0_i32_1 = arith.constant 0 : i32
    return %c0_i32, %c0_i32_0 : i32, i32
  }
  func.func @transform_3(%arg0: i32) -> (i32, i32) {
    %c0_i32 = arith.constant 0 : i32
    %c0_i32_0 = arith.constant 0 : i32
    return %arg0, %c0_i32 : i32, i32
  }
}

module attributes {stable_mosaic.version = 11 : i64} {
  func.func @_linear_res_ln_kernel(%arg0: i32, %arg1: memref<16x64xbf16, #tpu.memory_space<vmem>>, %arg2: memref<64x32xbf16, #tpu.memory_space<vmem>>, %arg3: memref<1x32xf32, #tpu.memory_space<vmem>>, %arg4: memref<16x32xbf16, #tpu.memory_space<vmem>>, %arg5: memref<1x32xf32, #tpu.memory_space<vmem>>, %arg6: memref<1x32xf32, #tpu.memory_space<vmem>>, %arg7: memref<16x32xbf16, #tpu.memory_space<vmem>>) attributes {dimension_semantics = [#tpu.dimension_semantics<parallel>], iteration_bounds = array<i64: 1>, scalar_prefetch = 0 : i64, scratch_operands = 0 : i64, tpu.core_type = #tpu.core_type<tc>, window_params = [{transform_indices = @transform_0, window_bounds = array<i64: 16, 64>}, {pipeline_mode = #tpu.pipeline_mode<synchronous>, transform_indices = @transform_1, window_bounds = array<i64: 64, 32>}, {pipeline_mode = #tpu.pipeline_mode<synchronous>, transform_indices = @transform_2, window_bounds = array<i64: 1, 32>}, {transform_indices = @transform_3, window_bounds = array<i64: 16, 32>}, {pipeline_mode = #tpu.pipeline_mode<synchronous>, transform_indices = @transform_4, window_bounds = array<i64: 1, 32>}, {pipeline_mode = #tpu.pipeline_mode<synchronous>, transform_indices = @transform_5, window_bounds = array<i64: 1, 32>}, {transform_indices = @transform_6, window_bounds = array<i64: 16, 32>}]} {
    %c0 = arith.constant 0 : index
    %c0_0 = arith.constant 0 : index
    %0 = vector.load %arg1[%c0, %c0_0] : memref<16x64xbf16, #tpu.memory_space<vmem>>, vector<16x64xbf16>
    %c0_1 = arith.constant 0 : index
    %c0_2 = arith.constant 0 : index
    %1 = vector.load %arg2[%c0_1, %c0_2] : memref<64x32xbf16, #tpu.memory_space<vmem>>, vector<64x32xbf16>
    %cst = arith.constant dense<0.000000e+00> : vector<16x32xf32>
    %2 = tpu.matmul %0, %1, %cst {dimension_numbers = #tpu.dot_dimension_numbers<[1], [0], [0], [1], [0, 0, 1, 1], [], []>} : vector<16x64xbf16>, vector<64x32xbf16>, vector<16x32xf32> -> vector<16x32xf32>
    %c0_3 = arith.constant 0 : index
    %c0_4 = arith.constant 0 : index
    %3 = vector.load %arg3[%c0_3, %c0_4] : memref<1x32xf32, #tpu.memory_space<vmem>>, vector<1x32xf32>
    %4 = vector.broadcast %3 : vector<1x32xf32> to vector<16x32xf32>
    %5 = arith.addf %2, %4 : vector<16x32xf32>
    %c0_5 = arith.constant 0 : index
    %c0_6 = arith.constant 0 : index
    %6 = vector.load %arg4[%c0_5, %c0_6] : memref<16x32xbf16, #tpu.memory_space<vmem>>, vector<16x32xbf16>
    %7 = arith.extf %6 : vector<16x32xbf16> to vector<16x32xf32>
    %8 = arith.addf %5, %7 : vector<16x32xf32>
    %cst_7 = arith.constant dense<0.000000e+00> : vector<16xf32>
    %9 = vector.multi_reduction <add>, %8, %cst_7 [1] : vector<16x32xf32> to vector<16xf32>
    %10 = vector.shape_cast %9 : vector<16xf32> to vector<16x1xf32>
    %cst_8 = arith.constant 3.200000e+01 : f32
    %11 = vector.broadcast %cst_8 : f32 to vector<16x1xf32>
    %12 = arith.divf %10, %11 : vector<16x1xf32>
    %13 = vector.broadcast %12 : vector<16x1xf32> to vector<16x32xf32>
    %14 = arith.subf %8, %13 : vector<16x32xf32>
    %15 = arith.mulf %14, %14 : vector<16x32xf32>
    %cst_9 = arith.constant dense<0.000000e+00> : vector<16xf32>
    %16 = vector.multi_reduction <add>, %15, %cst_9 [1] : vector<16x32xf32> to vector<16xf32>
    %17 = vector.shape_cast %16 : vector<16xf32> to vector<16x1xf32>
    %cst_10 = arith.constant 3.200000e+01 : f32
    %18 = vector.broadcast %cst_10 : f32 to vector<16x1xf32>
    %19 = arith.divf %17, %18 : vector<16x1xf32>
    %20 = vector.broadcast %12 : vector<16x1xf32> to vector<16x32xf32>
    %21 = arith.subf %8, %20 : vector<16x32xf32>
    %cst_11 = arith.constant 9.99999996E-13 : f32
    %22 = vector.broadcast %cst_11 : f32 to vector<16x1xf32>
    %23 = arith.addf %19, %22 : vector<16x1xf32>
    %24 = math.rsqrt %23 : vector<16x1xf32>
    %25 = vector.broadcast %24 : vector<16x1xf32> to vector<16x32xf32>
    %26 = arith.mulf %21, %25 : vector<16x32xf32>
    %c0_12 = arith.constant 0 : index
    %c0_13 = arith.constant 0 : index
    %27 = vector.load %arg5[%c0_12, %c0_13] : memref<1x32xf32, #tpu.memory_space<vmem>>, vector<1x32xf32>
    %28 = vector.broadcast %27 : vector<1x32xf32> to vector<16x32xf32>
    %29 = arith.mulf %26, %28 : vector<16x32xf32>
    %c0_14 = arith.constant 0 : index
    %c0_15 = arith.constant 0 : index
    %30 = vector.load %arg6[%c0_14, %c0_15] : memref<1x32xf32, #tpu.memory_space<vmem>>, vector<1x32xf32>
    %31 = vector.broadcast %30 : vector<1x32xf32> to vector<16x32xf32>
    %32 = arith.addf %29, %31 : vector<16x32xf32>
    %33 = arith.truncf %32 : vector<16x32xf32> to vector<16x32xbf16>
    %c0_16 = arith.constant 0 : index
    %c0_17 = arith.constant 0 : index
    %34 = vector.load %arg7[%c0_16, %c0_17] : memref<16x32xbf16, #tpu.memory_space<vmem>>, vector<16x32xbf16>
    tpu.vector_store %arg7[%c0_16, %c0_17], %33 {strides = array<i32>} : memref<16x32xbf16, #tpu.memory_space<vmem>>, vector<16x32xbf16>,
    return
  }
  func.func @transform_0(%arg0: i32) -> (i32, i32) {
    %c0_i32 = arith.constant 0 : i32
    %c0_i32_0 = arith.constant 0 : i32
    return %arg0, %c0_i32 : i32, i32
  }
  func.func @transform_1(%arg0: i32) -> (i32, i32) {
    %c0_i32 = arith.constant 0 : i32
    %c0_i32_0 = arith.constant 0 : i32
    %c0_i32_1 = arith.constant 0 : i32
    return %c0_i32, %c0_i32_0 : i32, i32
  }
  func.func @transform_2(%arg0: i32) -> (i32, i32) {
    %c0_i32 = arith.constant 0 : i32
    %c0_i32_0 = arith.constant 0 : i32
    %c0_i32_1 = arith.constant 0 : i32
    return %c0_i32, %c0_i32_0 : i32, i32
  }
  func.func @transform_3(%arg0: i32) -> (i32, i32) {
    %c0_i32 = arith.constant 0 : i32
    %c0_i32_0 = arith.constant 0 : i32
    return %arg0, %c0_i32 : i32, i32
  }
  func.func @transform_4(%arg0: i32) -> (i32, i32) {
    %c0_i32 = arith.constant 0 : i32
    %c0_i32_0 = arith.constant 0 : i32
    %c0_i32_1 = arith.constant 0 : i32
    return %c0_i32, %c0_i32_0 : i32, i32
  }
  func.func @transform_5(%arg0: i32) -> (i32, i32) {
    %c0_i32 = arith.constant 0 : i32
    %c0_i32_0 = arith.constant 0 : i32
    %c0_i32_1 = arith.constant 0 : i32
    return %c0_i32, %c0_i32_0 : i32, i32
  }
  func.func @transform_6(%arg0: i32) -> (i32, i32) {
    %c0_i32 = arith.constant 0 : i32
    %c0_i32_0 = arith.constant 0 : i32
    return %arg0, %c0_i32 : i32, i32
  }
}

module attributes {stable_mosaic.version = 11 : i64} {
  func.func @_pooler_classifier_kernel(%arg0: i32, %arg1: memref<2x32xbf16, #tpu.memory_space<vmem>>, %arg2: memref<32x32xbf16, #tpu.memory_space<vmem>>, %arg3: memref<1x32xf32, #tpu.memory_space<vmem>>, %arg4: memref<1x32xbf16, #tpu.memory_space<vmem>>, %arg5: memref<1x1xf32, #tpu.memory_space<vmem>>, %arg6: memref<2x1xf32, #tpu.memory_space<vmem>>) attributes {dimension_semantics = [#tpu.dimension_semantics<arbitrary>], iteration_bounds = array<i64: 1>, scalar_prefetch = 0 : i64, scratch_operands = 0 : i64, tpu.core_type = #tpu.core_type<tc>, window_params = [{pipeline_mode = #tpu.pipeline_mode<synchronous>, transform_indices = @transform_0, window_bounds = array<i64: 2, 32>}, {pipeline_mode = #tpu.pipeline_mode<synchronous>, transform_indices = @transform_1, window_bounds = array<i64: 32, 32>}, {pipeline_mode = #tpu.pipeline_mode<synchronous>, transform_indices = @transform_2, window_bounds = array<i64: 1, 32>}, {pipeline_mode = #tpu.pipeline_mode<synchronous>, transform_indices = @transform_3, window_bounds = array<i64: 1, 32>}, {pipeline_mode = #tpu.pipeline_mode<synchronous>, transform_indices = @transform_4, window_bounds = array<i64: 1, 1>}, {pipeline_mode = #tpu.pipeline_mode<synchronous>, transform_indices = @transform_5, window_bounds = array<i64: 2, 1>}]} {
    %c0 = arith.constant 0 : index
    %c0_0 = arith.constant 0 : index
    %0 = vector.load %arg1[%c0, %c0_0] : memref<2x32xbf16, #tpu.memory_space<vmem>>, vector<2x32xbf16>
    %c0_1 = arith.constant 0 : index
    %c0_2 = arith.constant 0 : index
    %1 = vector.load %arg2[%c0_1, %c0_2] : memref<32x32xbf16, #tpu.memory_space<vmem>>, vector<32x32xbf16>
    %cst = arith.constant dense<0.000000e+00> : vector<2x32xf32>
    %2 = tpu.matmul %0, %1, %cst {dimension_numbers = #tpu.dot_dimension_numbers<[1], [0], [0], [1], [0, 0, 1, 1], [], []>} : vector<2x32xbf16>, vector<32x32xbf16>, vector<2x32xf32> -> vector<2x32xf32>
    %c0_3 = arith.constant 0 : index
    %c0_4 = arith.constant 0 : index
    %3 = vector.load %arg3[%c0_3, %c0_4] : memref<1x32xf32, #tpu.memory_space<vmem>>, vector<1x32xf32>
    %4 = vector.broadcast %3 : vector<1x32xf32> to vector<2x32xf32>
    %5 = arith.addf %2, %4 : vector<2x32xf32>
    %6 = math.tanh %5 : vector<2x32xf32>
    %c0_5 = arith.constant 0 : index
    %c0_6 = arith.constant 0 : index
    %7 = vector.load %arg4[%c0_5, %c0_6] : memref<1x32xbf16, #tpu.memory_space<vmem>>, vector<1x32xbf16>
    %8 = arith.extf %7 : vector<1x32xbf16> to vector<1x32xf32>
    %9 = vector.broadcast %8 : vector<1x32xf32> to vector<2x32xf32>
    %10 = arith.mulf %6, %9 : vector<2x32xf32>
    %cst_7 = arith.constant dense<0.000000e+00> : vector<2xf32>
    %11 = vector.multi_reduction <add>, %10, %cst_7 [1] : vector<2x32xf32> to vector<2xf32>
    %12 = vector.shape_cast %11 : vector<2xf32> to vector<2x1xf32>
    %c0_8 = arith.constant 0 : index
    %c0_9 = arith.constant 0 : index
    %13 = vector.load %arg5[%c0_8, %c0_9] : memref<1x1xf32, #tpu.memory_space<vmem>>, vector<1x1xf32>
    %14 = vector.broadcast %13 : vector<1x1xf32> to vector<2x1xf32>
    %15 = arith.addf %12, %14 : vector<2x1xf32>
    %c0_10 = arith.constant 0 : index
    %c0_11 = arith.constant 0 : index
    %16 = vector.load %arg6[%c0_10, %c0_11] : memref<2x1xf32, #tpu.memory_space<vmem>>, vector<2x1xf32>
    tpu.vector_store %arg6[%c0_10, %c0_11], %15 {strides = array<i32>} : memref<2x1xf32, #tpu.memory_space<vmem>>, vector<2x1xf32>,
    return
  }
  func.func @transform_0(%arg0: i32) -> (i32, i32) {
    %c0_i32 = arith.constant 0 : i32
    %c0_i32_0 = arith.constant 0 : i32
    %c0_i32_1 = arith.constant 0 : i32
    return %c0_i32, %c0_i32_0 : i32, i32
  }
  func.func @transform_1(%arg0: i32) -> (i32, i32) {
    %c0_i32 = arith.constant 0 : i32
    %c0_i32_0 = arith.constant 0 : i32
    %c0_i32_1 = arith.constant 0 : i32
    return %c0_i32, %c0_i32_0 : i32, i32
  }
  func.func @transform_2(%arg0: i32) -> (i32, i32) {
    %c0_i32 = arith.constant 0 : i32
    %c0_i32_0 = arith.constant 0 : i32
    %c0_i32_1 = arith.constant 0 : i32
    return %c0_i32, %c0_i32_0 : i32, i32
  }
  func.func @transform_3(%arg0: i32) -> (i32, i32) {
    %c0_i32 = arith.constant 0 : i32
    %c0_i32_0 = arith.constant 0 : i32
    %c0_i32_1 = arith.constant 0 : i32
    return %c0_i32, %c0_i32_0 : i32, i32
  }
  func.func @transform_4(%arg0: i32) -> (i32, i32) {
    %c0_i32 = arith.constant 0 : i32
    %c0_i32_0 = arith.constant 0 : i32
    %c0_i32_1 = arith.constant 0 : i32
    return %c0_i32, %c0_i32_0 : i32, i32
  }
  func.func @transform_5(%arg0: i32) -> (i32, i32) {
    %c0_i32 = arith.constant 0 : i32
    %c0_i32_0 = arith.constant 0 : i32
    %c0_i32_1 = arith.constant 0 : i32
    return %c0_i32, %c0_i32_0 : i32, i32
  }
}

</mosaic_0001>

<llo_original>
// kernel: tpu_custom_call.1
$region0: #{tpu_custom_call.1}
  #allocation0 [shape = 'u32[]', space=smem, size = 0x4, offset = 0x4, fixed_abs, tag = 'smem constant byte address 0x4 - core index']
  #allocation1 [shape = 'u32[144,128]{1,0:T(1,128)}', space=vmem, size = 0x12000, scoped, tag = 'internal scratch']
  %s0 = inlined_call_operand.hbm [shape: f32[8,128], index: 0, kind: input, shape index: {}]
  %s1 = inlined_call_operand.hbm [shape: f32[8,128], index: 1, kind: output, shape index: {}]
  %s2 = sld [smem:[#allocation0]]
  $region41: #{tpu_custom_call.1} parent=0
    _
  %s4 = ssub.s32 1, %s2
  %s5 = scalar_select 0, %s4, %s2
  $region1: #{tpu_custom_call.1} parent=0
    #allocation2 [shape = 'u8[4096]{0}', space=vmem, size = 0x1000, scoped, tag = 'input window, operand 0, single buffered']
    #allocation3 [shape = 's32[2]{0}', space=sflag, size = 0x8, scoped, tag = 'scoped memory for tpu_custom_call.1']
    #allocation4 [shape = 's32[2]{0}', space=sflag, size = 0x8, scoped, tag = 'scoped memory for tpu_custom_call.1']
    #allocation5 [shape = 'u8[4096]{0}', space=vmem, size = 0x1000, scoped, tag = 'output window, operand 0, single buffered']
    %6 = vsyncpa [#allocation3], 0
    %7 = vsyncpa [#allocation4], 0
    loop: start=0, step=1, limit=4
    $region2: #{tpu_custom_call.1} parent=1 // loop_pre_header
      _
    $region3: #{tpu_custom_call.1} parent=1 // loop_header
      %s9 = sphi 0, %s13
      %p10 = scmp.ge.s32.totalorder %s9, 4
      %s17 = sphi 0, %s17
      %s19 = sphi 0, %s17
      %s20 = sphi 0, %s19
      %s34 = sphi 0, %s20
      %s38 = sphi 0, %s38
      %s40 = sphi 0, %s38
      %s41 = sphi 0, %s40
      %s55 = sphi 0, %s41
    $region4: #{tpu_custom_call.1} parent=1 // loop_header_branch
      %12 = sbr.rel (%p10) target = $region8
    $region5: #{tpu_custom_call.1} parent=1 // loop_body
      %s14 = ssub.s32 %s9, 1
      %s15 = ssub.s32 %s9, 2
      %s16 = sadd.s32 %s9, 1
      %s18 = sadd.s32 %s17, 1
      %p21 = scmp.eq.s32.totalorder %s9, 1
      %p22 = scmp.ne.s32.totalorder %s17, %s19
      %p23 = scmp.eq.s32.totalorder %s9, 0
      %p24 = por %p22, %p23
      %p25 = scmp.ne.s32.totalorder %s17, %s19
      %p26 = scmp.eq.s32.totalorder %s14, 1
      %p27 = por %p25, %p26
      %p28 = scmp.ne.s32.totalorder %s19, %s20
      %p29 = scmp.eq.s32.totalorder %s14, 0
      %p30 = por %p28, %p29
      %p31 = scmp.ne.s32.totalorder %s19, %s20
      %p32 = scmp.eq.s32.totalorder %s15, 1
      %p33 = por %p31, %p32
      %p35 = scmp.ne.s32.totalorder %s20, %s34
      %p36 = scmp.eq.s32.totalorder %s15, 0
      %p37 = por %p35, %p36
      %s39 = sadd.s32 %s38, 1
      %p42 = scmp.eq.s32.totalorder %s9, 1
      %p43 = scmp.ne.s32.totalorder %s38, %s40
      %p44 = scmp.eq.s32.totalorder %s9, 0
      %p45 = por %p43, %p44
      %p46 = scmp.ne.s32.totalorder %s38, %s40
      %p47 = scmp.eq.s32.totalorder %s14, 1
      %p48 = por %p46, %p47
      %p49 = scmp.ne.s32.totalorder %s40, %s41
      %p50 = scmp.eq.s32.totalorder %s14, 0
      %p51 = por %p49, %p50
      %p52 = scmp.ne.s32.totalorder %s40, %s41
      %p53 = scmp.eq.s32.totalorder %s15, 1
      %p54 = por %p52, %p53
      %p56 = scmp.ne.s32.totalorder %s41, %s55
      %p57 = scmp.eq.s32.totalorder %s15, 0
      %p58 = por %p56, %p57
      %p59 = scmp.le.s32.totalorder 1, %s9
      %p60 = scmp.lt.s32.totalorder %s9, 3
      %p61 = pnand %p59, %p60
      %p62 = pneg %p61
      // Predicated region
      $region9: #{tpu_custom_call.1} parent=5 // pred_check
        _
      $region10: #{tpu_custom_call.1} parent=5 // pred_check_branch
        %64 = sbr.rel (%p61) target = $region12
      $region11: #{tpu_custom_call.1} parent=5 // pred_region
        %s65 = ssub.s32 %s9, 1
        // Predicated region
        $region13: #{tpu_custom_call.1} parent=11 // pred_check
          %p66 = pneg %p30
        $region14: #{tpu_custom_call.1} parent=11 // pred_check_branch
          %68 = sbr.rel (%p66) target = $region16
        $region15: #{tpu_custom_call.1} parent=11 // pred_region
          %s70 = ssub.s32 128, 128
          %71 = vsyncadd [#allocation3], %s70
          %s73 = sshll.u32 [#allocation2], 4
          %s74 = int_to_ptr.vmem [resolvable:$true] %s73
          %76 = dma.hbm_to_vmem [thread:$0]  %s0, 128, %s74, [#allocation3]
        $region16: #{tpu_custom_call.1} parent=11 // pred_fallthru
          _
      $region12: #{tpu_custom_call.1} parent=5 // pred_fallthru
        _
      %p77 = scmp.lt.s32.totalorder %s9, 2
      // Predicated region
      $region17: #{tpu_custom_call.1} parent=5 // pred_check
        %p78 = pneg %p77
      $region18: #{tpu_custom_call.1} parent=5 // pred_check_branch
        %80 = sbr.rel (%p78) target = $region20
      $region19: #{tpu_custom_call.1} parent=5 // pred_region
        _
      $region20: #{tpu_custom_call.1} parent=5 // pred_fallthru
        _
      %p81 = scmp.le.s32.totalorder 1, %s9
      %p82 = scmp.lt.s32.totalorder %s9, 3
      %p83 = pnand %p81, %p82
      %p84 = pneg %p83
      // Predicated region
      $region21: #{tpu_custom_call.1} parent=5 // pred_check
        _
      $region22: #{tpu_custom_call.1} parent=5 // pred_check_branch
        %86 = sbr.rel (%p83) target = $region24
      $region23: #{tpu_custom_call.1} parent=5 // pred_region
        %s87 = ssub.s32 %s9, 1
        // Predicated region
        $region25: #{tpu_custom_call.1} parent=23 // pred_check
          %p88 = pneg %p30
        $region26: #{tpu_custom_call.1} parent=23 // pred_check_branch
          %90 = sbr.rel (%p88) target = $region28
        $region27: #{tpu_custom_call.1} parent=23 // pred_region
          %91 = dma.done [#allocation3], 128
        $region28: #{tpu_custom_call.1} parent=23 // pred_fallthru
          _
        %p92 = pneg %p30
        %p93 = pneg %p27
        %p94 = pneg %p51
        %p95 = pneg %p48
        %v96 = vld [vmem:[#allocation2] sm:$0xff]
        %v97 = vadd.f32 %v96, 1.0
        %98 = vst [vmem:[#allocation5] sm:$0xff] %v97
        // Predicated region
        $region29: #{tpu_custom_call.1} parent=23 // pred_check
          %p99 = pneg %p48
        $region30: #{tpu_custom_call.1} parent=23 // pred_check_branch
          %101 = sbr.rel (%p99) target = $region32
        $region31: #{tpu_custom_call.1} parent=23 // pred_region
          %s103 = ssub.s32 128, 128
          %104 = vsyncadd [#allocation4], %s103
          %s106 = sshll.u32 [#allocation5], 4
          %s107 = int_to_ptr.vmem [resolvable:$true] %s106
          %109 = dma.vmem_to_hbm [thread:$0]  %s107, 128, %s1, [#allocation4]
        $region32: #{tpu_custom_call.1} parent=23 // pred_fallthru
          _
        // Predicated region
        $region33: #{tpu_custom_call.1} parent=23 // pred_check
          %p110 = pneg %p48
        $region34: #{tpu_custom_call.1} parent=23 // pred_check_branch
          %112 = sbr.rel (%p110) target = $region36
        $region35: #{tpu_custom_call.1} parent=23 // pred_region
          %113 = dma.done [#allocation4], 128
        $region36: #{tpu_custom_call.1} parent=23 // pred_fallthru
          _
      $region24: #{tpu_custom_call.1} parent=5 // pred_fallthru
        _
      %p114 = scmp.le.s32.totalorder 2, %s9
      // Predicated region
      $region37: #{tpu_custom_call.1} parent=5 // pred_check
        %p115 = pneg %p114
      $region38: #{tpu_custom_call.1} parent=5 // pred_check_branch
        %117 = sbr.rel (%p115) target = $region40
      $region39: #{tpu_custom_call.1} parent=5 // pred_region
        %s118 = ssub.s32 %s9, 2
      $region40: #{tpu_custom_call.1} parent=5 // pred_fallthru
        _
    $region6: #{tpu_custom_call.1} parent=1 // loop_footer
      %s13 = sadd.s32 1, %s9
    $region7: #{tpu_custom_call.1} parent=1 // loop_footer_branch
      %8 = sbr.rel target = $region3
    $region8: #{tpu_custom_call.1} parent=1 // loop_exit
      _
    %119 = vsyncpa [#allocation3], 1
    %s120 = scalar_lea.sflag [#allocation3], 1
    %121 = vsyncpa %s120, 1
    %122 = vsyncpa [#allocation4], 1
    %s123 = scalar_lea.sflag [#allocation4], 1
    %124 = vsyncpa %s123, 1

// kernel: _lambda_.12
$region0: #{_lambda_.12}
  #allocation0 [shape = 'u32[]', space=smem, size = 0x4, offset = 0x4, fixed_abs, tag = 'smem constant byte address 0x4 - core index']
  #allocation1 [shape = 'u32[144,128]{1,0:T(1,128)}', space=vmem, size = 0x12000, scoped, tag = 'internal scratch']
  %s0 = inlined_call_operand.vmem [shape: bf16[16,32], index: 0, kind: input, shape index: {}]
  %s1 = inlined_call_operand.vmem [shape: f32[1,32], index: 1, kind: input, shape index: {}]
  %s2 = inlined_call_operand.vmem [shape: f32[1,32], index: 2, kind: input, shape index: {}]
  %s3 = inlined_call_operand.vmem [shape: bf16[16,32], index: 3, kind: output, shape index: {}]
  %s4 = sld [smem:[#allocation0]]
  $region22: #{_lambda_.12} parent=0
    _
  %s6 = ssub.s32 1, %s4
  %s7 = scalar_select 0, %s6, %s4
  // Predicated region
  $region2: #{_lambda_.12} parent=0 // pred_check
    _
  $region3: #{_lambda_.12} parent=0 // pred_check_branch
    %9 = sbr.rel (0) target = $region5
  $region4: #{_lambda_.12} parent=0 // pred_region
    _
  $region5: #{_lambda_.12} parent=0 // pred_fallthru
    _
  // Predicated region
  $region6: #{_lambda_.12} parent=0 // pred_check
    _
  $region7: #{_lambda_.12} parent=0 // pred_check_branch
    %11 = sbr.rel (0) target = $region9
  $region8: #{_lambda_.12} parent=0 // pred_region
    _
  $region9: #{_lambda_.12} parent=0 // pred_fallthru
    _
  // Predicated region
  $region10: #{_lambda_.12} parent=0 // pred_check
    _
  $region11: #{_lambda_.12} parent=0 // pred_check_branch
    %13 = sbr.rel (0) target = $region13
  $region12: #{_lambda_.12} parent=0 // pred_region
    _
  $region13: #{_lambda_.12} parent=0 // pred_fallthru
    _
  %v14 = vld [vmem:[%s0] sm:$0xf]
  %v15 = vld [vmem:[%s0 + $0x4] sm:$0xf]
  %v16 = vunpack.c.l.bf16 %v14
  %v17 = vunpack.c.l.bf16 %v15
  %vm18 = vcmask 261120
  %v19 = vsel %vm18, %v16, 0.0
  %20 = vadd.xlane.f32.xlu0 %v19
  %v21 = vpop.xlane.xlu0 %20
  %v22 = vsel %vm18, %v17, 0.0
  %23 = vadd.xlane.f32.xlu0 %v22
  %v24 = vpop.xlane.xlu0 %23
  %v25 = vrcp.pop 32.0
  %v26 = vmul.f32 %v21, %v25
  %v27 = vmul.f32 %v24, %v25
  %v28 = vsub.f32 %v16, %v26
  %v29 = vsub.f32 %v17, %v27
  %v30 = vmul.f32 %v28, %v28
  %v31 = vmul.f32 %v29, %v29
  %v32 = vsel %vm18, %v30, 0.0
  %33 = vadd.xlane.f32.xlu0 %v32
  %v34 = vpop.xlane.xlu0 %33
  %v35 = vsel %vm18, %v31, 0.0
  %36 = vadd.xlane.f32.xlu0 %v35
  %v37 = vpop.xlane.xlu0 %36
  %v38 = vmul.f32 %v34, %v25
  %v39 = vmul.f32 %v37, %v25
  %v40 = vadd.f32 %v38, 1e-12
  %v41 = vadd.f32 %v39, 1e-12
  %v42 = vrsqrt.pop %v40
  %v43 = vrsqrt.pop %v41
  %v44 = vmul.f32 %v28, %v42
  %v45 = vmul.f32 %v29, %v43
  %v46 = vld [vmem:[%s1] sm:$0x1]
  %v48 = vlaneseq
  %v49 = vshrl.u32 %v48, 7
  %v50 = vsub.s32 0, %v49
  %v51 = vrot.slane %v46, %v50
  %v53 = vmul.f32 %v44, %v51
  %v54 = vmul.f32 %v45, %v51
  %v55 = vld [vmem:[%s2] sm:$0x1]
  %v57 = vlaneseq
  %v58 = vshrl.u32 %v57, 7
  %v59 = vsub.s32 0, %v58
  %v60 = vrot.slane %v55, %v59
  %v62 = vadd.f32 %v53, %v60
  %v63 = vadd.f32 %v54, %v60
  %v64 = vpack.c.bf16 %v63, %v62
  %v66 = vunpack.c.l.b16 %v64
  %v67 = vunpack.c.h.b16 %v64
  %v68 = vpack.c.b16 %v66, %v66
  %v69 = vpack.c.b16 %v67, %v67
  %vm72 = vcmask 257024
  %73 = vst.msk [vmem:[%s3] sm:$0xf] %vm72, %v68
  %74 = vst.msk [vmem:[%s3 + $0x4] sm:$0xf] %vm72, %v69
  // Predicated region
  $region14: #{_lambda_.12} parent=0 // pred_check
    _
  $region15: #{_lambda_.12} parent=0 // pred_check_branch
    %76 = sbr.rel (0) target = $region17
  $region16: #{_lambda_.12} parent=0 // pred_region
    _
  $region17: #{_lambda_.12} parent=0 // pred_fallthru
    _
  // Predicated region
  $region18: #{_lambda_.12} parent=0 // pred_check
    _
  $region19: #{_lambda_.12} parent=0 // pred_check_branch
    %78 = sbr.rel (0) target = $region21
  $region20: #{_lambda_.12} parent=0 // pred_region
    _
  $region21: #{_lambda_.12} parent=0 // pred_fallthru
    _

// kernel: _lambda_.13
$region0: #{_lambda_.13}
  #allocation0 [shape = 'u32[]', space=smem, size = 0x4, offset = 0x4, fixed_abs, tag = 'smem constant byte address 0x4 - core index']
  #allocation1 [shape = 'u32[144,128]{1,0:T(1,128)}', space=vmem, size = 0x12000, scoped, tag = 'internal scratch']
  %s0 = inlined_call_operand.vmem [shape: bf16[16,32], index: 0, kind: input, shape index: {}]
  %s1 = inlined_call_operand.vmem [shape: bf16[32,96], index: 1, kind: input, shape index: {}]
  %s2 = inlined_call_operand.vmem [shape: f32[1,96], index: 2, kind: input, shape index: {}]
  %s3 = inlined_call_operand.vmem [shape: bf16[16,96], index: 3, kind: output, shape index: {}]
  %s4 = sld [smem:[#allocation0]]
  $region22: #{_lambda_.13} parent=0
    _
  %s6 = ssub.s32 1, %s4
  %s7 = scalar_select 0, %s6, %s4
  // Predicated region
  $region2: #{_lambda_.13} parent=0 // pred_check
    _
  $region3: #{_lambda_.13} parent=0 // pred_check_branch
    %9 = sbr.rel (0) target = $region5
  $region4: #{_lambda_.13} parent=0 // pred_region
    _
  $region5: #{_lambda_.13} parent=0 // pred_fallthru
    _
  // Predicated region
  $region6: #{_lambda_.13} parent=0 // pred_check
    _
  $region7: #{_lambda_.13} parent=0 // pred_check_branch
    %11 = sbr.rel (0) target = $region9
  $region8: #{_lambda_.13} parent=0 // pred_region
    _
  $region9: #{_lambda_.13} parent=0 // pred_fallthru
    _
  // Predicated region
  $region10: #{_lambda_.13} parent=0 // pred_check
    _
  $region11: #{_lambda_.13} parent=0 // pred_check_branch
    %13 = sbr.rel (0) target = $region13
  $region12: #{_lambda_.13} parent=0 // pred_region
    _
  $region13: #{_lambda_.13} parent=0 // pred_fallthru
    _
  %v15 = vld [vmem:[%s0] sm:$0xf]
  %v16 = vld [vmem:[%s0 + $0x4] sm:$0xf]
  %v17 = vld [vmem:[%s1] sm:$0xf]
  %v18 = vld [vmem:[%s1 + $0x4] sm:$0xf]
  %v19 = vld [vmem:[%s1 + $0x8] sm:$0xf]
  %v20 = vld [vmem:[%s1 + $0xc] sm:$0xf]
  %v21 = vld [vmem:[%s2] sm:$0x1]
  %v23 = vlaneseq
  %v24 = vshrl.u32 %v23, 7
  %v25 = vsub.s32 0, %v24
  %v26 = vrot.slane %v21, %v25
  %v30 = vunpack.c.l.b16 %v15
  %v31 = vunpack.c.l.b16 %v16
  %v32 = vpack.c.b16 %v31, %v30
  %v37 = vunpack.c.l.b16 %v17
  %v38 = vunpack.c.l.b16 %v18
  %v39 = vunpack.c.l.b16 %v19
  %v40 = vunpack.c.l.b16 %v20
  %v41 = vpack.c.b16 %v38, %v37
  %v42 = vpack.c.b16 %v40, %v39
  %vm45 = vcmask 261120
  %v47 = vsel %vm45, %v32, 0
  %49 = vmatprep.subr.bf16.mxu0 0
  %50 = vmatpush1.bf16.msra.mxu0 0
  %51 = vmatprep.subr.bf16.mxu0 0
  %52 = vmatpush1.bf16.msra.mxu0 0
  %53 = vmatprep.subr.bf16.mxu0 0
  %54 = vmatpush1.bf16.msra.mxu0 0
  %55 = vmatprep.subr.bf16.mxu0 0
  %56 = vmatpush1.bf16.msra.mxu0 0
  %57 = vmatprep.subr.bf16.mxu0 0
  %58 = vmatpush1.bf16.msra.mxu0 0
  %59 = vmatprep.subr.bf16.mxu0 0
  %60 = vmatpush1.bf16.msra.mxu0 0
  %61 = vmatprep.subr.bf16.mxu0 0
  %62 = vmatpush1.bf16.msra.mxu0 %v42
  %63 = vmatprep.subr.bf16.mxu0 0
  %64 = vmatpush1.bf16.msra.mxu0 %v41
  %65 = vmatprep.subr.bf16.mxu0 0
  %66 = vmatpush2.bf16.msra.mxu0 0
  %67 = vmatprep.subr.bf16.mxu0 0
  %68 = vmatpush2.bf16.msra.mxu0 0
  %69 = vmatprep.subr.bf16.mxu0 0
  %70 = vmatpush2.bf16.msra.mxu0 0
  %71 = vmatprep.subr.bf16.mxu0 0
  %72 = vmatpush2.bf16.msra.mxu0 0
  %73 = vmatprep.subr.bf16.mxu0 0
  %74 = vmatpush2.bf16.msra.mxu0 0
  %75 = vmatprep.subr.bf16.mxu0 0
  %76 = vmatpush2.bf16.msra.mxu0 0
  %77 = vmatprep.subr.bf16.mxu0 0
  %78 = vmatpush2.bf16.msra.mxu0 0
  %79 = vmatprep.subr.bf16.mxu0 0
  %80 = vmatpush2.bf16.msra.mxu0 0
  %81 = vmatprep.mubr.bf16.mxu0 0
  %82 = vmatmul.mubr.bf16.gmra.mxu0 %v47
  %v83 = vpop.f32.mrf.mxu0
  %v84 = vadd.f32 %v26, %v83
  %v85 = vpop.f32.mrf.mxu0
  %v86 = vpop.f32.mrf.mxu0
  %v87 = vadd.f32 %v26, %v86
  %v88 = vpop.f32.mrf.mxu0
  %89 = vdwg.mxu0
  %v90 = vpack.c.bf16 %v87, %v84
  %v92 = vunpack.c.l.b16 %v90
  %v93 = vunpack.c.h.b16 %v90
  %v94 = vpack.c.b16 %v92, %v92
  %v95 = vpack.c.b16 %v93, %v93
  %vm98 = vcmask 781312
  %99 = vst.msk [vmem:[%s3] sm:$0xf] %vm98, %v94
  %100 = vst.msk [vmem:[%s3 + $0x4] sm:$0xf] %vm98, %v95
  // Predicated region
  $region14: #{_lambda_.13} parent=0 // pred_check
    _
  $region15: #{_lambda_.13} parent=0 // pred_check_branch
    %102 = sbr.rel (0) target = $region17
  $region16: #{_lambda_.13} parent=0 // pred_region
    _
  $region17: #{_lambda_.13} parent=0 // pred_fallthru
    _
  // Predicated region
  $region18: #{_lambda_.13} parent=0 // pred_check
    _
  $region19: #{_lambda_.13} parent=0 // pred_check_branch
    %104 = sbr.rel (0) target = $region21
  $region20: #{_lambda_.13} parent=0 // pred_region
    _
  $region21: #{_lambda_.13} parent=0 // pred_fallthru
    _

// kernel: _lambda_.14
$region0: #{_lambda_.14}
  #allocation0 [shape = 'u32[]', space=smem, size = 0x4, offset = 0x4, fixed_abs, tag = 'smem constant byte address 0x4 - core index']
  #allocation1 [shape = 'u32[144,128]{1,0:T(1,128)}', space=vmem, size = 0x12000, scoped, tag = 'internal scratch']
  %s0 = inlined_call_operand.vmem [shape: bf16[2,8,96], index: 0, kind: input, shape index: {}]
  %s1 = inlined_call_operand.vmem [shape: f32[2,1,8], index: 1, kind: input, shape index: {}]
  %s2 = inlined_call_operand.vmem [shape: bf16[2,8,32], index: 2, kind: output, shape index: {}]
  %s3 = sld [smem:[#allocation0]]
  $region41: #{_lambda_.14} parent=0
    _
  %s5 = ssub.s32 1, %s3
  %s6 = scalar_select 0, %s5, %s3
  loop: start=0, step=1, limit=4
  $region2: #{_lambda_.14} parent=0 // loop_pre_header
    _
  $region3: #{_lambda_.14} parent=0 // loop_header
    %s8 = sphi 0, %s12
    %p9 = scmp.ge.s32.totalorder %s8, 4
    %s15 = sphi 0, %s27
    %s16 = sphi 0, %s23
    %s17 = sphi 0, %s15
    %s18 = sphi 0, %s16
    %s19 = sphi 0, %s17
    %s20 = sphi 0, %s18
    %s30 = sphi 0, %s32
    %s33 = sphi 0, %s30
    %s34 = sphi 0, %s33
    %s50 = sphi 0, %s34
    %s56 = sphi 0, %s58
    %s59 = sphi 0, %s56
    %s60 = sphi 0, %s59
    %s76 = sphi 0, %s60
    %s84 = sphi 0, %s86
    %s87 = sphi 0, %s84
    %s88 = sphi 0, %s87
    %s104 = sphi 0, %s88
  $region4: #{_lambda_.14} parent=0 // loop_header_branch
    %11 = sbr.rel (%p9) target = $region8
  $region5: #{_lambda_.14} parent=0 // loop_body
    %s13 = ssub.s32 %s8, 1
    %s14 = ssub.s32 %s8, 2
    %s21 = sadd.s32 1, %s16
    %p22 = scmp.ge.s32.totalorder %s21, 1
    %s23 = scalar_select %p22, 0, %s21
    %s24 = sadd.s32 1, %s15
    %s25 = scalar_select %p22, %s24, %s15
    %p26 = scmp.ge.s32.totalorder %s25, 2
    %s27 = scalar_select %p26, 0, %s25
    %s28 = ssub.s32 %s15, %s27
    %p29 = scmp.eq.s32.totalorder %s28, 0
    %s31 = sadd.s32 %s30, 1
    %s32 = scalar_select %p29, %s30, %s31
    %p35 = pneg %p29
    %p36 = scmp.eq.s32.totalorder %s8, 1
    %p37 = por %p35, %p36
    %p38 = scmp.ne.s32.totalorder %s30, %s33
    %p39 = scmp.eq.s32.totalorder %s8, 0
    %p40 = por %p38, %p39
    %p41 = scmp.ne.s32.totalorder %s30, %s33
    %p42 = scmp.eq.s32.totalorder %s13, 1
    %p43 = por %p41, %p42
    %p44 = scmp.ne.s32.totalorder %s33, %s34
    %p45 = scmp.eq.s32.totalorder %s13, 0
    %p46 = por %p44, %p45
    %p47 = scmp.ne.s32.totalorder %s33, %s34
    %p48 = scmp.eq.s32.totalorder %s14, 1
    %p49 = por %p47, %p48
    %p51 = scmp.ne.s32.totalorder %s34, %s50
    %p52 = scmp.eq.s32.totalorder %s14, 0
    %p53 = por %p51, %p52
    %s54 = ssub.s32 %s15, %s27
    %p55 = scmp.eq.s32.totalorder %s54, 0
    %s57 = sadd.s32 %s56, 1
    %s58 = scalar_select %p55, %s56, %s57
    %p61 = pneg %p55
    %p62 = scmp.eq.s32.totalorder %s8, 1
    %p63 = por %p61, %p62
    %p64 = scmp.ne.s32.totalorder %s56, %s59
    %p65 = scmp.eq.s32.totalorder %s8, 0
    %p66 = por %p64, %p65
    %p67 = scmp.ne.s32.totalorder %s56, %s59
    %p68 = scmp.eq.s32.totalorder %s13, 1
    %p69 = por %p67, %p68
    %p70 = scmp.ne.s32.totalorder %s59, %s60
    %p71 = scmp.eq.s32.totalorder %s13, 0
    %p72 = por %p70, %p71
    %p73 = scmp.ne.s32.totalorder %s59, %s60
    %p74 = scmp.eq.s32.totalorder %s14, 1
    %p75 = por %p73, %p74
    %p77 = scmp.ne.s32.totalorder %s60, %s76
    %p78 = scmp.eq.s32.totalorder %s14, 0
    %p79 = por %p77, %p78
    %s80 = ssub.s32 %s15, %s27
    %s81 = ssub.s32 %s16, %s23
    %s82 = sor.u32 %s80, %s81
    %p83 = scmp.eq.s32.totalorder %s82, 0
    %s85 = sadd.s32 %s84, 1
    %s86 = scalar_select %p83, %s84, %s85
    %p89 = pneg %p83
    %p90 = scmp.eq.s32.totalorder %s8, 1
    %p91 = por %p89, %p90
    %p92 = scmp.ne.s32.totalorder %s84, %s87
    %p93 = scmp.eq.s32.totalorder %s8, 0
    %p94 = por %p92, %p93
    %p95 = scmp.ne.s32.totalorder %s84, %s87
    %p96 = scmp.eq.s32.totalorder %s13, 1
    %p97 = por %p95, %p96
    %p98 = scmp.ne.s32.totalorder %s87, %s88
    %p99 = scmp.eq.s32.totalorder %s13, 0
    %p100 = por %p98, %p99
    %p101 = scmp.ne.s32.totalorder %s87, %s88
    %p102 = scmp.eq.s32.totalorder %s14, 1
    %p103 = por %p101, %p102
    %p105 = scmp.ne.s32.totalorder %s88, %s104
    %p106 = scmp.eq.s32.totalorder %s14, 0
    %p107 = por %p105, %p106
    %p108 = scmp.le.s32.totalorder 1, %s8
    %p109 = scmp.lt.s32.totalorder %s8, 3
    %p110 = pnand %p108, %p109
    %p111 = pneg %p110
    // Predicated region
    $region9: #{_lambda_.14} parent=5 // pred_check
      _
    $region10: #{_lambda_.14} parent=5 // pred_check_branch
      %113 = sbr.rel (%p110) target = $region12
    $region11: #{_lambda_.14} parent=5 // pred_region
      %s114 = ssub.s32 %s8, 1
    $region12: #{_lambda_.14} parent=5 // pred_fallthru
      _
    %p115 = scmp.lt.s32.totalorder %s8, 2
    // Predicated region
    $region13: #{_lambda_.14} parent=5 // pred_check
      %p116 = pneg %p115
    $region14: #{_lambda_.14} parent=5 // pred_check_branch
      %118 = sbr.rel (%p116) target = $region16
    $region15: #{_lambda_.14} parent=5 // pred_region
      // Predicated region
      $region17: #{_lambda_.14} parent=15 // pred_check
        %p119 = pneg %p40
      $region18: #{_lambda_.14} parent=15 // pred_check_branch
        %121 = sbr.rel (%p119) target = $region20
      $region19: #{_lambda_.14} parent=15 // pred_region
        %p122 = scmp.lt.s32.totalorder %s15, 1
        %s123 = scalar_select %p122, %s15, 1
        %s124 = smul.addr %s123, 4
        %s125 = scalar_lea.vmem %s0, %s124
      $region20: #{_lambda_.14} parent=15 // pred_fallthru
        _
      // Predicated region
      $region21: #{_lambda_.14} parent=15 // pred_check
        %p126 = pneg %p66
      $region22: #{_lambda_.14} parent=15 // pred_check_branch
        %128 = sbr.rel (%p126) target = $region24
      $region23: #{_lambda_.14} parent=15 // pred_region
        %p129 = scmp.lt.s32.totalorder %s15, 1
        %s130 = scalar_select %p129, %s15, 1
        %s131 = scalar_lea.vmem %s1, %s130
      $region24: #{_lambda_.14} parent=15 // pred_fallthru
        _
    $region16: #{_lambda_.14} parent=5 // pred_fallthru
      _
    %p132 = scmp.le.s32.totalorder 1, %s8
    %p133 = scmp.lt.s32.totalorder %s8, 3
    %p134 = pnand %p132, %p133
    %p135 = pneg %p134
    // Predicated region
    $region25: #{_lambda_.14} parent=5 // pred_check
      _
    $region26: #{_lambda_.14} parent=5 // pred_check_branch
      %137 = sbr.rel (%p134) target = $region28
    $region27: #{_lambda_.14} parent=5 // pred_region
      %s138 = ssub.s32 %s8, 1
      %p139 = scmp.lt.s32.totalorder %s17, 1
      %s140 = scalar_select %p139, %s17, 1
      %s141 = smul.addr %s140, 4
      %s142 = scalar_lea.vmem %s0, %s141
      %p143 = pneg %p46
      %p144 = pneg %p43
      %p145 = scmp.lt.s32.totalorder %s17, 1
      %s146 = scalar_select %p145, %s17, 1
      %s147 = scalar_lea.vmem %s1, %s146
      %p148 = pneg %p72
      %p149 = pneg %p69
      %p150 = pneg %p100
      %p151 = pneg %p97
      %p152 = scmp.lt.s32.totalorder %s17, 1
      %s153 = scalar_select %p152, %s17, 1
      %p154 = scmp.lt.s32.totalorder %s18, 0
      %s155 = scalar_select %p154, %s18, 0
      %s156 = sadd.s32 %s155, %s153
      %s157 = smul.addr %s156, 4
      %s158 = scalar_lea.vmem %s2, %s157
      %p159 = scmp.lt.s32.totalorder %s17, 1
      %s160 = scalar_select %p159, %s17, 1
      %s161 = smul.addr %s160, 4
      %s162 = scalar_lea.vmem %s0, %s161
      %p163 = scmp.lt.s32.totalorder %s17, 1
      %s164 = scalar_select %p163, %s17, 1
      %s165 = scalar_lea.vmem %s1, %s164
      %p166 = scmp.lt.s32.totalorder %s17, 1
      %s167 = scalar_select %p166, %s17, 1
      %p168 = scmp.lt.s32.totalorder %s18, 0
      %s169 = scalar_select %p168, %s18, 0
      %s170 = sadd.s32 %s169, %s167
      %s171 = smul.addr %s170, 4
      %s172 = scalar_lea.vmem %s2, %s171
      %v175 = vld [vmem:[%s162] sm:$0xf]
      %v176 = vld [vmem:[%s165] sm:$0x1]
      %v177 = vmul.bf16 %v175, 1048592000
      %v179 = vlaneseq
      %v180 = vshrl.u32 %v179, 7
      %v181 = vsub.s32 0, %v180
      %v182 = vrot.slane %v176, %v181
      %v185 = vunpack.c.l.b16 %v175
      %v186 = vpack.c.b16 %v185, %v185
      %187 = vrot.lane.b32.xlu0 %v186, 96
      %v188 = vpop.permute.xlu0 %187
      %vm189 = vcmask 130048
      %v191 = vsel %vm189, %v177, 0
      %v194 = vsel %vm189, %v188, 0
      %196 = vmatprep.subr.bf16.mxu0 0
      %197 = vmatpush1.bf16.xpose.msra.mxu0 0
      %198 = vmatprep.subr.bf16.mxu0 0
      %199 = vmatpush1.bf16.xpose.msra.mxu0 0
      %200 = vmatprep.subr.bf16.mxu0 0
      %201 = vmatpush1.bf16.xpose.msra.mxu0 0
      %202 = vmatprep.subr.bf16.mxu0 0
      %203 = vmatpush1.bf16.xpose.msra.mxu0 0
      %204 = vmatprep.subr.bf16.mxu0 0
      %205 = vmatpush1.bf16.xpose.msra.mxu0 0
      %206 = vmatprep.subr.bf16.mxu0 0
      %207 = vmatpush1.bf16.xpose.msra.mxu0 0
      %208 = vmatprep.subr.bf16.mxu0 0
      %209 = vmatpush1.bf16.xpose.msra.mxu0 0
      %210 = vmatprep.subr.bf16.mxu0 0
      %211 = vmatpush1.bf16.xpose.msra.mxu0 %v194
      %212 = vmatprep.subr.bf16.mxu0 0
      %213 = vmatpush2.bf16.xpose.msra.mxu0 0
      %214 = vmatprep.subr.bf16.mxu0 0
      %215 = vmatpush2.bf16.xpose.msra.mxu0 0
      %216 = vmatprep.subr.bf16.mxu0 0
      %217 = vmatpush2.bf16.xpose.msra.mxu0 0
      %218 = vmatprep.subr.bf16.mxu0 0
      %219 = vmatpush2.bf16.xpose.msra.mxu0 0
      %220 = vmatprep.subr.bf16.mxu0 0
      %221 = vmatpush2.bf16.xpose.msra.mxu0 0
      %222 = vmatprep.subr.bf16.mxu0 0
      %223 = vmatpush2.bf16.xpose.msra.mxu0 0
      %224 = vmatprep.subr.bf16.mxu0 0
      %225 = vmatpush2.bf16.xpose.msra.mxu0 0
      %226 = vmatprep.subr.bf16.mxu0 0
      %227 = vmatpush2.bf16.xpose.msra.mxu0 0
      %228 = vmatprep.mubr.bf16.mxu0 0
      %229 = vmatmul.mubr.bf16.gmra.mxu0 %v191
      %v230 = vpop.f32.mrf.mxu0
      %v231 = vadd.f32 %v182, %v230
      %v232 = vpop.f32.mrf.mxu0
      %v233 = vpop.f32.mrf.mxu0
      %v234 = vpop.f32.mrf.mxu0
      %235 = vdwg.mxu0
      %vm236 = vcmask 64512
      %v237 = vsel %vm236, %v231, -inf
      %238 = vmax.xlane.f32.xlu0 %v237
      %v239 = vpop.xlane.xlu0 %238
      %v240 = vsub.f32 %v231, %v239
      %v241 = vmul.f32 %v240, 1.442695
      %v242 = vpow.pop %v241
      %v243 = vsel %vm236, %v242, 0.0
      %244 = vadd.xlane.f32.xlu0 %v243
      %v245 = vpop.xlane.xlu0 %244
      %v246 = vrcp.pop %v245
      %v247 = vpack.c.bf16 %v242, %v242
      %248 = vrot.lane.b32.xlu0 %v186, 64
      %v249 = vpop.permute.xlu0 %248
      %v251 = vsel %vm236, %v247, 0
      %vm253 = vcmask 1043456
      %v255 = vsel %vm253, %v249, 0
      %257 = vmatprep.subr.bf16.mxu0 0
      %258 = vmatpush1.bf16.msra.mxu0 0
      %259 = vmatprep.subr.bf16.mxu0 0
      %260 = vmatpush1.bf16.msra.mxu0 0
      %261 = vmatprep.subr.bf16.mxu0 0
      %262 = vmatpush1.bf16.msra.mxu0 0
      %263 = vmatprep.subr.bf16.mxu0 0
      %264 = vmatpush1.bf16.msra.mxu0 0
      %265 = vmatprep.subr.bf16.mxu0 0
      %266 = vmatpush1.bf16.msra.mxu0 0
      %267 = vmatprep.subr.bf16.mxu0 0
      %268 = vmatpush1.bf16.msra.mxu0 0
      %269 = vmatprep.subr.bf16.mxu0 0
      %270 = vmatpush1.bf16.msra.mxu0 0
      %271 = vmatprep.subr.bf16.mxu0 0
      %272 = vmatpush1.bf16.msra.mxu0 %v255
      %273 = vmatprep.subr.bf16.mxu0 0
      %274 = vmatpush2.bf16.msra.mxu0 0
      %275 = vmatprep.subr.bf16.mxu0 0
      %276 = vmatpush2.bf16.msra.mxu0 0
      %277 = vmatprep.subr.bf16.mxu0 0
      %278 = vmatpush2.bf16.msra.mxu0 0
      %279 = vmatprep.subr.bf16.mxu0 0
      %280 = vmatpush2.bf16.msra.mxu0 0
      %281 = vmatprep.subr.bf16.mxu0 0
      %282 = vmatpush2.bf16.msra.mxu0 0
      %283 = vmatprep.subr.bf16.mxu0 0
      %284 = vmatpush2.bf16.msra.mxu0 0
      %285 = vmatprep.subr.bf16.mxu0 0
      %286 = vmatpush2.bf16.msra.mxu0 0
      %287 = vmatprep.subr.bf16.mxu0 0
      %288 = vmatpush2.bf16.msra.mxu0 0
      %289 = vmatprep.mubr.bf16.mxu0 0
      %290 = vmatmul.mubr.bf16.gmra.mxu0 %v251
      %v291 = vpop.f32.mrf.mxu0
      %v292 = vadd.f32 0.0, %v291
      %v293 = vpop.f32.mrf.mxu0
      %v294 = vpop.f32.mrf.mxu0
      %v295 = vpop.f32.mrf.mxu0
      %296 = vdwg.mxu0
      %v297 = vmul.f32 %v292, %v246
      %v298 = vpack.c.bf16 %v297, %v297
      %vm299 = vcmask 125952
      %300 = vst.msk [vmem:[%s172] sm:$0xf] %vm299, %v298
      %v302 = vunpack.c.l.b16 %v177
      %v303 = vpack.c.b16 %v302, %v302
      %304 = vrot.lane.b32.xlu0 %v303, 112
      %v305 = vpop.permute.xlu0 %304
      %306 = vrot.lane.b32.xlu0 %v186, 80
      %v307 = vpop.permute.xlu0 %306
      %v309 = vsel %vm189, %v305, 0
      %v312 = vsel %vm189, %v307, 0
      %314 = vmatprep.subr.bf16.mxu0 0
      %315 = vmatpush1.bf16.xpose.msra.mxu0 0
      %316 = vmatprep.subr.bf16.mxu0 0
      %317 = vmatpush1.bf16.xpose.msra.mxu0 0
      %318 = vmatprep.subr.bf16.mxu0 0
      %319 = vmatpush1.bf16.xpose.msra.mxu0 0
      %320 = vmatprep.subr.bf16.mxu0 0
      %321 = vmatpush1.bf16.xpose.msra.mxu0 0
      %322 = vmatprep.subr.bf16.mxu0 0
      %323 = vmatpush1.bf16.xpose.msra.mxu0 0
      %324 = vmatprep.subr.bf16.mxu0 0
      %325 = vmatpush1.bf16.xpose.msra.mxu0 0
      %326 = vmatprep.subr.bf16.mxu0 0
      %327 = vmatpush1.bf16.xpose.msra.mxu0 0
      %328 = vmatprep.subr.bf16.mxu0 0
      %329 = vmatpush1.bf16.xpose.msra.mxu0 %v312
      %330 = vmatprep.subr.bf16.mxu0 0
      %331 = vmatpush2.bf16.xpose.msra.mxu0 0
      %332 = vmatprep.subr.bf16.mxu0 0
      %333 = vmatpush2.bf16.xpose.msra.mxu0 0
      %334 = vmatprep.subr.bf16.mxu0 0
      %335 = vmatpush2.bf16.xpose.msra.mxu0 0
      %336 = vmatprep.subr.bf16.mxu0 0
      %337 = vmatpush2.bf16.xpose.msra.mxu0 0
      %338 = vmatprep.subr.bf16.mxu0 0
      %339 = vmatpush2.bf16.xpose.msra.mxu0 0
      %340 = vmatprep.subr.bf16.mxu0 0
      %341 = vmatpush2.bf16.xpose.msra.mxu0 0
      %342 = vmatprep.subr.bf16.mxu0 0
      %343 = vmatpush2.bf16.xpose.msra.mxu0 0
      %344 = vmatprep.subr.bf16.mxu0 0
      %345 = vmatpush2.bf16.xpose.msra.mxu0 0
      %346 = vmatprep.mubr.bf16.mxu0 0
      %347 = vmatmul.mubr.bf16.gmra.mxu0 %v309
      %v348 = vpop.f32.mrf.mxu0
      %v349 = vadd.f32 %v182, %v348
      %v350 = vpop.f32.mrf.mxu0
      %v351 = vpop.f32.mrf.mxu0
      %v352 = vpop.f32.mrf.mxu0
      %353 = vdwg.mxu0
      %v354 = vsel %vm236, %v349, -inf
      %355 = vmax.xlane.f32.xlu0 %v354
      %v356 = vpop.xlane.xlu0 %355
      %v357 = vsub.f32 %v349, %v356
      %v358 = vmul.f32 %v357, 1.442695
      %v359 = vpow.pop %v358
      %v360 = vsel %vm236, %v359, 0.0
      %361 = vadd.xlane.f32.xlu0 %v360
      %v362 = vpop.xlane.xlu0 %361
      %v363 = vrcp.pop %v362
      %v364 = vpack.c.bf16 %v359, %v359
      %365 = vrot.lane.b32.xlu0 %v186, 48
      %v366 = vpop.permute.xlu0 %365
      %v368 = vsel %vm236, %v364, 0
      %v371 = vsel %vm253, %v366, 0
      %373 = vmatprep.subr.bf16.mxu0 0
      %374 = vmatpush1.bf16.msra.mxu0 0
      %375 = vmatprep.subr.bf16.mxu0 0
      %376 = vmatpush1.bf16.msra.mxu0 0
      %377 = vmatprep.subr.bf16.mxu0 0
      %378 = vmatpush1.bf16.msra.mxu0 0
      %379 = vmatprep.subr.bf16.mxu0 0
      %380 = vmatpush1.bf16.msra.mxu0 0
      %381 = vmatprep.subr.bf16.mxu0 0
      %382 = vmatpush1.bf16.msra.mxu0 0
      %383 = vmatprep.subr.bf16.mxu0 0
      %384 = vmatpush1.bf16.msra.mxu0 0
      %385 = vmatprep.subr.bf16.mxu0 0
      %386 = vmatpush1.bf16.msra.mxu0 0
      %387 = vmatprep.subr.bf16.mxu0 0
      %388 = vmatpush1.bf16.msra.mxu0 %v371
      %389 = vmatprep.subr.bf16.mxu0 0
      %390 = vmatpush2.bf16.msra.mxu0 0
      %391 = vmatprep.subr.bf16.mxu0 0
      %392 = vmatpush2.bf16.msra.mxu0 0
      %393 = vmatprep.subr.bf16.mxu0 0
      %394 = vmatpush2.bf16.msra.mxu0 0
      %395 = vmatprep.subr.bf16.mxu0 0
      %396 = vmatpush2.bf16.msra.mxu0 0
      %397 = vmatprep.subr.bf16.mxu0 0
      %398 = vmatpush2.bf16.msra.mxu0 0
      %399 = vmatprep.subr.bf16.mxu0 0
      %400 = vmatpush2.bf16.msra.mxu0 0
      %401 = vmatprep.subr.bf16.mxu0 0
      %402 = vmatpush2.bf16.msra.mxu0 0
      %403 = vmatprep.subr.bf16.mxu0 0
      %404 = vmatpush2.bf16.msra.mxu0 0
      %405 = vmatprep.mubr.bf16.mxu0 0
      %406 = vmatmul.mubr.bf16.gmra.mxu0 %v368
      %v407 = vpop.f32.mrf.mxu0
      %v408 = vadd.f32 0.0, %v407
      %v409 = vpop.f32.mrf.mxu0
      %v410 = vpop.f32.mrf.mxu0
      %v411 = vpop.f32.mrf.mxu0
      %412 = vdwg.mxu0
      %v413 = vmul.f32 %v408, %v363
      %v414 = vpack.c.bf16 %v413, %v413
      %v416 = vunpack.c.l.b16 %v414
      %v417 = vpack.c.b16 %v416, %v416
      %418 = vrot.lane.b32.xlu0 %v417, 16
      %v419 = vpop.permute.xlu0 %418
      %vm421 = vcmask 257152
      %422 = vst.msk [vmem:[%s172] sm:$0xf] %vm421, %v419
      %p423 = scmp.lt.s32.totalorder %s17, 1
      %s424 = scalar_select %p423, %s17, 1
      %p425 = scmp.lt.s32.totalorder %s18, 0
      %s426 = scalar_select %p425, %s18, 0
      %s427 = sadd.s32 %s426, %s424
      %s428 = smul.addr %s427, 4
      %s429 = scalar_lea.vmem %s2, %s428
      // Predicated region
      $region29: #{_lambda_.14} parent=27 // pred_check
        %p430 = pneg %p97
      $region30: #{_lambda_.14} parent=27 // pred_check_branch
        %432 = sbr.rel (%p430) target = $region32
      $region31: #{_lambda_.14} parent=27 // pred_region
        _
      $region32: #{_lambda_.14} parent=27 // pred_fallthru
        _
    $region28: #{_lambda_.14} parent=5 // pred_fallthru
      _
    %p433 = scmp.le.s32.totalorder 2, %s8
    // Predicated region
    $region33: #{_lambda_.14} parent=5 // pred_check
      %p434 = pneg %p433
    $region34: #{_lambda_.14} parent=5 // pred_check_branch
      %436 = sbr.rel (%p434) target = $region36
    $region35: #{_lambda_.14} parent=5 // pred_region
      %s437 = ssub.s32 %s8, 2
      // Predicated region
      $region37: #{_lambda_.14} parent=35 // pred_check
        %p438 = pneg %p103
      $region38: #{_lambda_.14} parent=35 // pred_check_branch
        %440 = sbr.rel (%p438) target = $region40
      $region39: #{_lambda_.14} parent=35 // pred_region
        %p441 = scmp.lt.s32.totalorder %s19, 1
        %s442 = scalar_select %p441, %s19, 1
        %p443 = scmp.lt.s32.totalorder %s20, 0
        %s444 = scalar_select %p443, %s20, 0
        %s445 = sadd.s32 %s444, %s442
        %s446 = smul.addr %s445, 4
        %s447 = scalar_lea.vmem %s2, %s446
      $region40: #{_lambda_.14} parent=35 // pred_fallthru
        _
    $region36: #{_lambda_.14} parent=5 // pred_fallthru
      _
  $region6: #{_lambda_.14} parent=0 // loop_footer
    %s12 = sadd.s32 1, %s8
  $region7: #{_lambda_.14} parent=0 // loop_footer_branch
    %7 = sbr.rel target = $region3
  $region8: #{_lambda_.14} parent=0 // loop_exit
    _

// kernel: _lambda_.15
$region0: #{_lambda_.15}
  #allocation0 [shape = 'u32[]', space=smem, size = 0x4, offset = 0x4, fixed_abs, tag = 'smem constant byte address 0x4 - core index']
  #allocation1 [shape = 'u32[144,128]{1,0:T(1,128)}', space=vmem, size = 0x12000, scoped, tag = 'internal scratch']
  %s0 = inlined_call_operand.vmem [shape: bf16[16,32], index: 0, kind: input, shape index: {}]
  %s1 = inlined_call_operand.vmem [shape: bf16[32,32], index: 1, kind: input, shape index: {}]
  %s2 = inlined_call_operand.vmem [shape: f32[1,32], index: 2, kind: input, shape index: {}]
  %s3 = inlined_call_operand.vmem [shape: bf16[16,32], index: 3, kind: input, shape index: {}]
  %s4 = inlined_call_operand.vmem [shape: f32[1,32], index: 4, kind: input, shape index: {}]
  %s5 = inlined_call_operand.vmem [shape: f32[1,32], index: 5, kind: input, shape index: {}]
  %s6 = inlined_call_operand.vmem [shape: bf16[16,32], index: 6, kind: output, shape index: {}]
  %s7 = sld [smem:[#allocation0]]
  $region34: #{_lambda_.15} parent=0
    _
  %s9 = ssub.s32 1, %s7
  %s10 = scalar_select 0, %s9, %s7
  // Predicated region
  $region2: #{_lambda_.15} parent=0 // pred_check
    _
  $region3: #{_lambda_.15} parent=0 // pred_check_branch
    %12 = sbr.rel (0) target = $region5
  $region4: #{_lambda_.15} parent=0 // pred_region
    _
  $region5: #{_lambda_.15} parent=0 // pred_fallthru
    _
  // Predicated region
  $region6: #{_lambda_.15} parent=0 // pred_check
    _
  $region7: #{_lambda_.15} parent=0 // pred_check_branch
    %14 = sbr.rel (0) target = $region9
  $region8: #{_lambda_.15} parent=0 // pred_region
    _
  $region9: #{_lambda_.15} parent=0 // pred_fallthru
    _
  // Predicated region
  $region10: #{_lambda_.15} parent=0 // pred_check
    _
  $region11: #{_lambda_.15} parent=0 // pred_check_branch
    %16 = sbr.rel (0) target = $region13
  $region12: #{_lambda_.15} parent=0 // pred_region
    _
  $region13: #{_lambda_.15} parent=0 // pred_fallthru
    _
  // Predicated region
  $region14: #{_lambda_.15} parent=0 // pred_check
    _
  $region15: #{_lambda_.15} parent=0 // pred_check_branch
    %18 = sbr.rel (0) target = $region17
  $region16: #{_lambda_.15} parent=0 // pred_region
    _
  $region17: #{_lambda_.15} parent=0 // pred_fallthru
    _
  // Predicated region
  $region18: #{_lambda_.15} parent=0 // pred_check
    _
  $region19: #{_lambda_.15} parent=0 // pred_check_branch
    %20 = sbr.rel (0) target = $region21
  $region20: #{_lambda_.15} parent=0 // pred_region
    _
  $region21: #{_lambda_.15} parent=0 // pred_fallthru
    _
  // Predicated region
  $region22: #{_lambda_.15} parent=0 // pred_check
    _
  $region23: #{_lambda_.15} parent=0 // pred_check_branch
    %22 = sbr.rel (0) target = $region25
  $region24: #{_lambda_.15} parent=0 // pred_region
    _
  $region25: #{_lambda_.15} parent=0 // pred_fallthru
    _
  %v24 = vld [vmem:[%s0] sm:$0xf]
  %v25 = vld [vmem:[%s0 + $0x4] sm:$0xf]
  %v26 = vld [vmem:[%s1] sm:$0xf]
  %v27 = vld [vmem:[%s1 + $0x4] sm:$0xf]
  %v28 = vld [vmem:[%s1 + $0x8] sm:$0xf]
  %v29 = vld [vmem:[%s1 + $0xc] sm:$0xf]
  %v30 = vld [vmem:[%s2] sm:$0x1]
  %v32 = vlaneseq
  %v33 = vshrl.u32 %v32, 7
  %v34 = vsub.s32 0, %v33
  %v35 = vrot.slane %v30, %v34
  %v39 = vunpack.c.l.b16 %v24
  %v40 = vunpack.c.l.b16 %v25
  %v41 = vpack.c.b16 %v40, %v39
  %v46 = vunpack.c.l.b16 %v26
  %v47 = vunpack.c.l.b16 %v27
  %v48 = vunpack.c.l.b16 %v28
  %v49 = vunpack.c.l.b16 %v29
  %v50 = vpack.c.b16 %v47, %v46
  %v51 = vpack.c.b16 %v49, %v48
  %vm54 = vcmask 261120
  %v56 = vsel %vm54, %v41, 0
  %58 = vmatprep.subr.bf16.mxu0 0
  %59 = vmatpush1.bf16.msra.mxu0 0
  %60 = vmatprep.subr.bf16.mxu0 0
  %61 = vmatpush1.bf16.msra.mxu0 0
  %62 = vmatprep.subr.bf16.mxu0 0
  %63 = vmatpush1.bf16.msra.mxu0 0
  %64 = vmatprep.subr.bf16.mxu0 0
  %65 = vmatpush1.bf16.msra.mxu0 0
  %66 = vmatprep.subr.bf16.mxu0 0
  %67 = vmatpush1.bf16.msra.mxu0 0
  %68 = vmatprep.subr.bf16.mxu0 0
  %69 = vmatpush1.bf16.msra.mxu0 0
  %70 = vmatprep.subr.bf16.mxu0 0
  %71 = vmatpush1.bf16.msra.mxu0 %v51
  %72 = vmatprep.subr.bf16.mxu0 0
  %73 = vmatpush1.bf16.msra.mxu0 %v50
  %74 = vmatprep.subr.bf16.mxu0 0
  %75 = vmatpush2.bf16.msra.mxu0 0
  %76 = vmatprep.subr.bf16.mxu0 0
  %77 = vmatpush2.bf16.msra.mxu0 0
  %78 = vmatprep.subr.bf16.mxu0 0
  %79 = vmatpush2.bf16.msra.mxu0 0
  %80 = vmatprep.subr.bf16.mxu0 0
  %81 = vmatpush2.bf16.msra.mxu0 0
  %82 = vmatprep.subr.bf16.mxu0 0
  %83 = vmatpush2.bf16.msra.mxu0 0
  %84 = vmatprep.subr.bf16.mxu0 0
  %85 = vmatpush2.bf16.msra.mxu0 0
  %86 = vmatprep.subr.bf16.mxu0 0
  %87 = vmatpush2.bf16.msra.mxu0 0
  %88 = vmatprep.subr.bf16.mxu0 0
  %89 = vmatpush2.bf16.msra.mxu0 0
  %90 = vmatprep.mubr.bf16.mxu0 0
  %91 = vmatmul.mubr.bf16.gmra.mxu0 %v56
  %v92 = vpop.f32.mrf.mxu0
  %v93 = vadd.f32 %v35, %v92
  %v94 = vpop.f32.mrf.mxu0
  %v95 = vpop.f32.mrf.mxu0
  %v96 = vadd.f32 %v35, %v95
  %v97 = vpop.f32.mrf.mxu0
  %98 = vdwg.mxu0
  %v99 = vld [vmem:[%s3] sm:$0xf]
  %v100 = vld [vmem:[%s3 + $0x4] sm:$0xf]
  %v101 = vunpack.c.l.bf16 %v99
  %v102 = vunpack.c.l.bf16 %v100
  %v103 = vadd.f32 %v93, %v101
  %v104 = vadd.f32 %v96, %v102
  %v105 = vsel %vm54, %v103, 0.0
  %106 = vadd.xlane.f32.xlu0 %v105
  %v107 = vpop.xlane.xlu0 %106
  %v108 = vsel %vm54, %v104, 0.0
  %109 = vadd.xlane.f32.xlu0 %v108
  %v110 = vpop.xlane.xlu0 %109
  %v111 = vrcp.pop 32.0
  %v112 = vmul.f32 %v107, %v111
  %v113 = vmul.f32 %v110, %v111
  %v114 = vsub.f32 %v103, %v112
  %v115 = vsub.f32 %v104, %v113
  %v116 = vmul.f32 %v114, %v114
  %v117 = vmul.f32 %v115, %v115
  %v118 = vsel %vm54, %v116, 0.0
  %119 = vadd.xlane.f32.xlu0 %v118
  %v120 = vpop.xlane.xlu0 %119
  %v121 = vsel %vm54, %v117, 0.0
  %122 = vadd.xlane.f32.xlu0 %v121
  %v123 = vpop.xlane.xlu0 %122
  %v124 = vmul.f32 %v120, %v111
  %v125 = vmul.f32 %v123, %v111
  %v126 = vadd.f32 %v124, 1e-12
  %v127 = vadd.f32 %v125, 1e-12
  %v128 = vrsqrt.pop %v126
  %v129 = vrsqrt.pop %v127
  %v130 = vmul.f32 %v114, %v128
  %v131 = vmul.f32 %v115, %v129
  %v132 = vld [vmem:[%s4] sm:$0x1]
  %v134 = vlaneseq
  %v135 = vshrl.u32 %v134, 7
  %v136 = vsub.s32 0, %v135
  %v137 = vrot.slane %v132, %v136
  %v139 = vmul.f32 %v130, %v137
  %v140 = vmul.f32 %v131, %v137
  %v141 = vld [vmem:[%s5] sm:$0x1]
  %v143 = vlaneseq
  %v144 = vshrl.u32 %v143, 7
  %v145 = vsub.s32 0, %v144
  %v146 = vrot.slane %v141, %v145
  %v148 = vadd.f32 %v139, %v146
  %v149 = vadd.f32 %v140, %v146
  %v150 = vpack.c.bf16 %v149, %v148
  %v152 = vunpack.c.l.b16 %v150
  %v153 = vunpack.c.h.b16 %v150
  %v154 = vpack.c.b16 %v152, %v152
  %v155 = vpack.c.b16 %v153, %v153
  %vm158 = vcmask 257024
  %159 = vst.msk [vmem:[%s6] sm:$0xf] %vm158, %v154
  %160 = vst.msk [vmem:[%s6 + $0x4] sm:$0xf] %vm158, %v155
  // Predicated region
  $region26: #{_lambda_.15} parent=0 // pred_check
    _
  $region27: #{_lambda_.15} parent=0 // pred_check_branch
    %162 = sbr.rel (0) target = $region29
  $region28: #{_lambda_.15} parent=0 // pred_region
    _
  $region29: #{_lambda_.15} parent=0 // pred_fallthru
    _
  // Predicated region
  $region30: #{_lambda_.15} parent=0 // pred_check
    _
  $region31: #{_lambda_.15} parent=0 // pred_check_branch
    %164 = sbr.rel (0) target = $region33
  $region32: #{_lambda_.15} parent=0 // pred_region
    _
  $region33: #{_lambda_.15} parent=0 // pred_fallthru
    _

// kernel: _lambda_.16
$region0: #{_lambda_.16}
  #allocation0 [shape = 'u32[]', space=smem, size = 0x4, offset = 0x4, fixed_abs, tag = 'smem constant byte address 0x4 - core index']
  #allocation1 [shape = 'u32[144,128]{1,0:T(1,128)}', space=vmem, size = 0x12000, scoped, tag = 'internal scratch']
  %s0 = inlined_call_operand.vmem [shape: bf16[16,32], index: 0, kind: input, shape index: {}]
  %s1 = inlined_call_operand.vmem [shape: bf16[32,64], index: 1, kind: input, shape index: {}]
  %s2 = inlined_call_operand.vmem [shape: f32[1,64], index: 2, kind: input, shape index: {}]
  %s3 = inlined_call_operand.vmem [shape: bf16[16,64], index: 3, kind: output, shape index: {}]
  %s4 = sld [smem:[#allocation0]]
  $region22: #{_lambda_.16} parent=0
    _
  %s6 = ssub.s32 1, %s4
  %s7 = scalar_select 0, %s6, %s4
  // Predicated region
  $region2: #{_lambda_.16} parent=0 // pred_check
    _
  $region3: #{_lambda_.16} parent=0 // pred_check_branch
    %9 = sbr.rel (0) target = $region5
  $region4: #{_lambda_.16} parent=0 // pred_region
    _
  $region5: #{_lambda_.16} parent=0 // pred_fallthru
    _
  // Predicated region
  $region6: #{_lambda_.16} parent=0 // pred_check
    _
  $region7: #{_lambda_.16} parent=0 // pred_check_branch
    %11 = sbr.rel (0) target = $region9
  $region8: #{_lambda_.16} parent=0 // pred_region
    _
  $region9: #{_lambda_.16} parent=0 // pred_fallthru
    _
  // Predicated region
  $region10: #{_lambda_.16} parent=0 // pred_check
    _
  $region11: #{_lambda_.16} parent=0 // pred_check_branch
    %13 = sbr.rel (0) target = $region13
  $region12: #{_lambda_.16} parent=0 // pred_region
    _
  $region13: #{_lambda_.16} parent=0 // pred_fallthru
    _
  %v15 = vld [vmem:[%s0] sm:$0xf]
  %v16 = vld [vmem:[%s0 + $0x4] sm:$0xf]
  %v17 = vld [vmem:[%s1] sm:$0xf]
  %v18 = vld [vmem:[%s1 + $0x4] sm:$0xf]
  %v19 = vld [vmem:[%s1 + $0x8] sm:$0xf]
  %v20 = vld [vmem:[%s1 + $0xc] sm:$0xf]
  %v21 = vld [vmem:[%s2] sm:$0x1]
  %v23 = vlaneseq
  %v24 = vshrl.u32 %v23, 7
  %v25 = vsub.s32 0, %v24
  %v26 = vrot.slane %v21, %v25
  %v30 = vunpack.c.l.b16 %v15
  %v31 = vunpack.c.l.b16 %v16
  %v32 = vpack.c.b16 %v31, %v30
  %v37 = vunpack.c.l.b16 %v17
  %v38 = vunpack.c.l.b16 %v18
  %v39 = vunpack.c.l.b16 %v19
  %v40 = vunpack.c.l.b16 %v20
  %v41 = vpack.c.b16 %v38, %v37
  %v42 = vpack.c.b16 %v40, %v39
  %vm45 = vcmask 261120
  %v47 = vsel %vm45, %v32, 0
  %49 = vmatprep.subr.bf16.mxu0 0
  %50 = vmatpush1.bf16.msra.mxu0 0
  %51 = vmatprep.subr.bf16.mxu0 0
  %52 = vmatpush1.bf16.msra.mxu0 0
  %53 = vmatprep.subr.bf16.mxu0 0
  %54 = vmatpush1.bf16.msra.mxu0 0
  %55 = vmatprep.subr.bf16.mxu0 0
  %56 = vmatpush1.bf16.msra.mxu0 0
  %57 = vmatprep.subr.bf16.mxu0 0
  %58 = vmatpush1.bf16.msra.mxu0 0
  %59 = vmatprep.subr.bf16.mxu0 0
  %60 = vmatpush1.bf16.msra.mxu0 0
  %61 = vmatprep.subr.bf16.mxu0 0
  %62 = vmatpush1.bf16.msra.mxu0 %v42
  %63 = vmatprep.subr.bf16.mxu0 0
  %64 = vmatpush1.bf16.msra.mxu0 %v41
  %65 = vmatprep.subr.bf16.mxu0 0
  %66 = vmatpush2.bf16.msra.mxu0 0
  %67 = vmatprep.subr.bf16.mxu0 0
  %68 = vmatpush2.bf16.msra.mxu0 0
  %69 = vmatprep.subr.bf16.mxu0 0
  %70 = vmatpush2.bf16.msra.mxu0 0
  %71 = vmatprep.subr.bf16.mxu0 0
  %72 = vmatpush2.bf16.msra.mxu0 0
  %73 = vmatprep.subr.bf16.mxu0 0
  %74 = vmatpush2.bf16.msra.mxu0 0
  %75 = vmatprep.subr.bf16.mxu0 0
  %76 = vmatpush2.bf16.msra.mxu0 0
  %77 = vmatprep.subr.bf16.mxu0 0
  %78 = vmatpush2.bf16.msra.mxu0 0
  %79 = vmatprep.subr.bf16.mxu0 0
  %80 = vmatpush2.bf16.msra.mxu0 0
  %81 = vmatprep.mubr.bf16.mxu0 0
  %82 = vmatmul.mubr.bf16.gmra.mxu0 %v47
  %v83 = vpop.f32.mrf.mxu0
  %v84 = vadd.f32 %v26, %v83
  %v85 = vpop.f32.mrf.mxu0
  %v86 = vpop.f32.mrf.mxu0
  %v87 = vadd.f32 %v26, %v86
  %v88 = vpop.f32.mrf.mxu0
  %89 = vdwg.mxu0
  %v90 = vmul.f32 %v84, %v84
  %v91 = vmul.f32 %v87, %v87
  %v92 = vmul.f32 %v84, %v90
  %v93 = vmul.f32 %v87, %v91
  %v94 = vmul.f32 %v92, 0.044715
  %v95 = vmul.f32 %v93, 0.044715
  %v96 = vadd.f32 %v84, %v94
  %v97 = vadd.f32 %v87, %v95
  %v98 = vmul.f32 %v96, 0.7978846
  %v99 = vmul.f32 %v97, 0.7978846
  %v100 = vtanh.pop %v98
  %v101 = vtanh.pop %v99
  %v102 = vadd.f32 %v100, 1.0
  %v103 = vadd.f32 %v101, 1.0
  %v104 = vmul.f32 %v102, 0.5
  %v105 = vmul.f32 %v103, 0.5
  %v106 = vmul.f32 %v84, %v104
  %v107 = vmul.f32 %v87, %v105
  %v108 = vpack.c.bf16 %v107, %v106
  %v110 = vunpack.c.l.b16 %v108
  %v111 = vunpack.c.h.b16 %v108
  %v112 = vpack.c.b16 %v110, %v110
  %v113 = vpack.c.b16 %v111, %v111
  %vm116 = vcmask 519168
  %117 = vst.msk [vmem:[%s3] sm:$0xf] %vm116, %v112
  %118 = vst.msk [vmem:[%s3 + $0x4] sm:$0xf] %vm116, %v113
  // Predicated region
  $region14: #{_lambda_.16} parent=0 // pred_check
    _
  $region15: #{_lambda_.16} parent=0 // pred_check_branch
    %120 = sbr.rel (0) target = $region17
  $region16: #{_lambda_.16} parent=0 // pred_region
    _
  $region17: #{_lambda_.16} parent=0 // pred_fallthru
    _
  // Predicated region
  $region18: #{_lambda_.16} parent=0 // pred_check
    _
  $region19: #{_lambda_.16} parent=0 // pred_check_branch
    %122 = sbr.rel (0) target = $region21
  $region20: #{_lambda_.16} parent=0 // pred_region
    _
  $region21: #{_lambda_.16} parent=0 // pred_fallthru
    _

// kernel: _lambda_.17
$region0: #{_lambda_.17}
  #allocation0 [shape = 'u32[]', space=smem, size = 0x4, offset = 0x4, fixed_abs, tag = 'smem constant byte address 0x4 - core index']
  #allocation1 [shape = 'u32[144,128]{1,0:T(1,128)}', space=vmem, size = 0x12000, scoped, tag = 'internal scratch']
  %s0 = inlined_call_operand.vmem [shape: bf16[16,64], index: 0, kind: input, shape index: {}]
  %s1 = inlined_call_operand.vmem [shape: bf16[64,32], index: 1, kind: input, shape index: {}]
  %s2 = inlined_call_operand.vmem [shape: f32[1,32], index: 2, kind: input, shape index: {}]
  %s3 = inlined_call_operand.vmem [shape: bf16[16,32], index: 3, kind: input, shape index: {}]
  %s4 = inlined_call_operand.vmem [shape: f32[1,32], index: 4, kind: input, shape index: {}]
  %s5 = inlined_call_operand.vmem [shape: f32[1,32], index: 5, kind: input, shape index: {}]
  %s6 = inlined_call_operand.vmem [shape: bf16[16,32], index: 6, kind: output, shape index: {}]
  %s7 = sld [smem:[#allocation0]]
  $region34: #{_lambda_.17} parent=0
    _
  %s9 = ssub.s32 1, %s7
  %s10 = scalar_select 0, %s9, %s7
  // Predicated region
  $region2: #{_lambda_.17} parent=0 // pred_check
    _
  $region3: #{_lambda_.17} parent=0 // pred_check_branch
    %12 = sbr.rel (0) target = $region5
  $region4: #{_lambda_.17} parent=0 // pred_region
    _
  $region5: #{_lambda_.17} parent=0 // pred_fallthru
    _
  // Predicated region
  $region6: #{_lambda_.17} parent=0 // pred_check
    _
  $region7: #{_lambda_.17} parent=0 // pred_check_branch
    %14 = sbr.rel (0) target = $region9
  $region8: #{_lambda_.17} parent=0 // pred_region
    _
  $region9: #{_lambda_.17} parent=0 // pred_fallthru
    _
  // Predicated region
  $region10: #{_lambda_.17} parent=0 // pred_check
    _
  $region11: #{_lambda_.17} parent=0 // pred_check_branch
    %16 = sbr.rel (0) target = $region13
  $region12: #{_lambda_.17} parent=0 // pred_region
    _
  $region13: #{_lambda_.17} parent=0 // pred_fallthru
    _
  // Predicated region
  $region14: #{_lambda_.17} parent=0 // pred_check
    _
  $region15: #{_lambda_.17} parent=0 // pred_check_branch
    %18 = sbr.rel (0) target = $region17
  $region16: #{_lambda_.17} parent=0 // pred_region
    _
  $region17: #{_lambda_.17} parent=0 // pred_fallthru
    _
  // Predicated region
  $region18: #{_lambda_.17} parent=0 // pred_check
    _
  $region19: #{_lambda_.17} parent=0 // pred_check_branch
    %20 = sbr.rel (0) target = $region21
  $region20: #{_lambda_.17} parent=0 // pred_region
    _
  $region21: #{_lambda_.17} parent=0 // pred_fallthru
    _
  // Predicated region
  $region22: #{_lambda_.17} parent=0 // pred_check
    _
  $region23: #{_lambda_.17} parent=0 // pred_check_branch
    %22 = sbr.rel (0) target = $region25
  $region24: #{_lambda_.17} parent=0 // pred_region
    _
  $region25: #{_lambda_.17} parent=0 // pred_fallthru
    _
  %v24 = vld [vmem:[%s0] sm:$0xf]
  %v25 = vld [vmem:[%s0 + $0x4] sm:$0xf]
  %v26 = vld [vmem:[%s1] sm:$0xf]
  %v27 = vld [vmem:[%s1 + $0x4] sm:$0xf]
  %v28 = vld [vmem:[%s1 + $0x8] sm:$0xf]
  %v29 = vld [vmem:[%s1 + $0xc] sm:$0xf]
  %v30 = vld [vmem:[%s1 + $0x10] sm:$0xf]
  %v31 = vld [vmem:[%s1 + $0x14] sm:$0xf]
  %v32 = vld [vmem:[%s1 + $0x18] sm:$0xf]
  %v33 = vld [vmem:[%s1 + $0x1c] sm:$0xf]
  %v34 = vld [vmem:[%s2] sm:$0x1]
  %v36 = vlaneseq
  %v37 = vshrl.u32 %v36, 7
  %v38 = vsub.s32 0, %v37
  %v39 = vrot.slane %v34, %v38
  %v43 = vunpack.c.l.b16 %v24
  %v44 = vunpack.c.l.b16 %v25
  %v45 = vpack.c.b16 %v44, %v43
  %v54 = vunpack.c.l.b16 %v26
  %v55 = vunpack.c.l.b16 %v27
  %v56 = vunpack.c.l.b16 %v28
  %v57 = vunpack.c.l.b16 %v29
  %v58 = vunpack.c.l.b16 %v30
  %v59 = vunpack.c.l.b16 %v31
  %v60 = vunpack.c.l.b16 %v32
  %v61 = vunpack.c.l.b16 %v33
  %v62 = vpack.c.b16 %v55, %v54
  %v63 = vpack.c.b16 %v57, %v56
  %v64 = vpack.c.b16 %v59, %v58
  %v65 = vpack.c.b16 %v61, %v60
  %vm70 = vcmask 523264
  %v72 = vsel %vm70, %v45, 0
  %74 = vmatprep.subr.bf16.mxu0 0
  %75 = vmatpush1.bf16.msra.mxu0 0
  %76 = vmatprep.subr.bf16.mxu0 0
  %77 = vmatpush1.bf16.msra.mxu0 0
  %78 = vmatprep.subr.bf16.mxu0 0
  %79 = vmatpush1.bf16.msra.mxu0 0
  %80 = vmatprep.subr.bf16.mxu0 0
  %81 = vmatpush1.bf16.msra.mxu0 0
  %82 = vmatprep.subr.bf16.mxu0 0
  %83 = vmatpush1.bf16.msra.mxu0 %v65
  %84 = vmatprep.subr.bf16.mxu0 0
  %85 = vmatpush1.bf16.msra.mxu0 %v64
  %86 = vmatprep.subr.bf16.mxu0 0
  %87 = vmatpush1.bf16.msra.mxu0 %v63
  %88 = vmatprep.subr.bf16.mxu0 0
  %89 = vmatpush1.bf16.msra.mxu0 %v62
  %90 = vmatprep.subr.bf16.mxu0 0
  %91 = vmatpush2.bf16.msra.mxu0 0
  %92 = vmatprep.subr.bf16.mxu0 0
  %93 = vmatpush2.bf16.msra.mxu0 0
  %94 = vmatprep.subr.bf16.mxu0 0
  %95 = vmatpush2.bf16.msra.mxu0 0
  %96 = vmatprep.subr.bf16.mxu0 0
  %97 = vmatpush2.bf16.msra.mxu0 0
  %98 = vmatprep.subr.bf16.mxu0 0
  %99 = vmatpush2.bf16.msra.mxu0 0
  %100 = vmatprep.subr.bf16.mxu0 0
  %101 = vmatpush2.bf16.msra.mxu0 0
  %102 = vmatprep.subr.bf16.mxu0 0
  %103 = vmatpush2.bf16.msra.mxu0 0
  %104 = vmatprep.subr.bf16.mxu0 0
  %105 = vmatpush2.bf16.msra.mxu0 0
  %106 = vmatprep.mubr.bf16.mxu0 0
  %107 = vmatmul.mubr.bf16.gmra.mxu0 %v72
  %v108 = vpop.f32.mrf.mxu0
  %v109 = vadd.f32 %v39, %v108
  %v110 = vpop.f32.mrf.mxu0
  %v111 = vpop.f32.mrf.mxu0
  %v112 = vadd.f32 %v39, %v111
  %v113 = vpop.f32.mrf.mxu0
  %114 = vdwg.mxu0
  %v115 = vld [vmem:[%s3] sm:$0xf]
  %v116 = vld [vmem:[%s3 + $0x4] sm:$0xf]
  %v117 = vunpack.c.l.bf16 %v115
  %v118 = vunpack.c.l.bf16 %v116
  %v119 = vadd.f32 %v109, %v117
  %v120 = vadd.f32 %v112, %v118
  %vm121 = vcmask 261120
  %v122 = vsel %vm121, %v119, 0.0
  %123 = vadd.xlane.f32.xlu0 %v122
  %v124 = vpop.xlane.xlu0 %123
  %v125 = vsel %vm121, %v120, 0.0
  %126 = vadd.xlane.f32.xlu0 %v125
  %v127 = vpop.xlane.xlu0 %126
  %v128 = vrcp.pop 32.0
  %v129 = vmul.f32 %v124, %v128
  %v130 = vmul.f32 %v127, %v128
  %v131 = vsub.f32 %v119, %v129
  %v132 = vsub.f32 %v120, %v130
  %v133 = vmul.f32 %v131, %v131
  %v134 = vmul.f32 %v132, %v132
  %v135 = vsel %vm121, %v133, 0.0
  %136 = vadd.xlane.f32.xlu0 %v135
  %v137 = vpop.xlane.xlu0 %136
  %v138 = vsel %vm121, %v134, 0.0
  %139 = vadd.xlane.f32.xlu0 %v138
  %v140 = vpop.xlane.xlu0 %139
  %v141 = vmul.f32 %v137, %v128
  %v142 = vmul.f32 %v140, %v128
  %v143 = vadd.f32 %v141, 1e-12
  %v144 = vadd.f32 %v142, 1e-12
  %v145 = vrsqrt.pop %v143
  %v146 = vrsqrt.pop %v144
  %v147 = vmul.f32 %v131, %v145
  %v148 = vmul.f32 %v132, %v146
  %v149 = vld [vmem:[%s4] sm:$0x1]
  %v151 = vlaneseq
  %v152 = vshrl.u32 %v151, 7
  %v153 = vsub.s32 0, %v152
  %v154 = vrot.slane %v149, %v153
  %v156 = vmul.f32 %v147, %v154
  %v157 = vmul.f32 %v148, %v154
  %v158 = vld [vmem:[%s5] sm:$0x1]
  %v160 = vlaneseq
  %v161 = vshrl.u32 %v160, 7
  %v162 = vsub.s32 0, %v161
  %v163 = vrot.slane %v158, %v162
  %v165 = vadd.f32 %v156, %v163
  %v166 = vadd.f32 %v157, %v163
  %v167 = vpack.c.bf16 %v166, %v165
  %v169 = vunpack.c.l.b16 %v167
  %v170 = vunpack.c.h.b16 %v167
  %v171 = vpack.c.b16 %v169, %v169
  %v172 = vpack.c.b16 %v170, %v170
  %vm175 = vcmask 257024
  %176 = vst.msk [vmem:[%s6] sm:$0xf] %vm175, %v171
  %177 = vst.msk [vmem:[%s6 + $0x4] sm:$0xf] %vm175, %v172
  // Predicated region
  $region26: #{_lambda_.17} parent=0 // pred_check
    _
  $region27: #{_lambda_.17} parent=0 // pred_check_branch
    %179 = sbr.rel (0) target = $region29
  $region28: #{_lambda_.17} parent=0 // pred_region
    _
  $region29: #{_lambda_.17} parent=0 // pred_fallthru
    _
  // Predicated region
  $region30: #{_lambda_.17} parent=0 // pred_check
    _
  $region31: #{_lambda_.17} parent=0 // pred_check_branch
    %181 = sbr.rel (0) target = $region33
  $region32: #{_lambda_.17} parent=0 // pred_region
    _
  $region33: #{_lambda_.17} parent=0 // pred_fallthru
    _

// kernel: _lambda_.23
$region0: #{_lambda_.23}
  #allocation0 [shape = 'u32[]', space=smem, size = 0x4, offset = 0x4, fixed_abs, tag = 'smem constant byte address 0x4 - core index']
  #allocation1 [shape = 'u32[144,128]{1,0:T(1,128)}', space=vmem, size = 0x12000, scoped, tag = 'internal scratch']
  #allocation2 [shape = 'f32[1,1]{1,0:T(1,128)S(1)}', space=vmem, size = 0x200, scoped, tag = 'scoped memory for _lambda_.23']
  %s0 = inlined_call_operand.vmem [shape: bf16[2,32], index: 0, kind: input, shape index: {}]
  %s1 = inlined_call_operand.vmem [shape: bf16[32,32], index: 1, kind: input, shape index: {}]
  %s2 = inlined_call_operand.vmem [shape: f32[1,32], index: 2, kind: input, shape index: {}]
  %s3 = inlined_call_operand.vmem [shape: bf16[1,32], index: 3, kind: input, shape index: {}]
  %s4 = inlined_call_operand.<no memory space> [shape: f32[1,1], index: 4, kind: input, shape index: {}]
  %s5 = inlined_call_operand.vmem [shape: f32[2,1], index: 5, kind: output, shape index: {}]
  %s6 = sld [smem:[#allocation0]]
  $region30: #{_lambda_.23} parent=0
    _
  %s8 = ssub.s32 1, %s6
  %s9 = scalar_select 0, %s8, %s6
  %v10 = vstv %s4
  %11 = vst [vmem:[#allocation2] sm:$0x1] %v10
  // Predicated region
  $region2: #{_lambda_.23} parent=0 // pred_check
    _
  $region3: #{_lambda_.23} parent=0 // pred_check_branch
    %13 = sbr.rel (0) target = $region5
  $region4: #{_lambda_.23} parent=0 // pred_region
    _
  $region5: #{_lambda_.23} parent=0 // pred_fallthru
    _
  // Predicated region
  $region6: #{_lambda_.23} parent=0 // pred_check
    _
  $region7: #{_lambda_.23} parent=0 // pred_check_branch
    %15 = sbr.rel (0) target = $region9
  $region8: #{_lambda_.23} parent=0 // pred_region
    _
  $region9: #{_lambda_.23} parent=0 // pred_fallthru
    _
  // Predicated region
  $region10: #{_lambda_.23} parent=0 // pred_check
    _
  $region11: #{_lambda_.23} parent=0 // pred_check_branch
    %17 = sbr.rel (0) target = $region13
  $region12: #{_lambda_.23} parent=0 // pred_region
    _
  $region13: #{_lambda_.23} parent=0 // pred_fallthru
    _
  // Predicated region
  $region14: #{_lambda_.23} parent=0 // pred_check
    _
  $region15: #{_lambda_.23} parent=0 // pred_check_branch
    %19 = sbr.rel (0) target = $region17
  $region16: #{_lambda_.23} parent=0 // pred_region
    _
  $region17: #{_lambda_.23} parent=0 // pred_fallthru
    _
  // Predicated region
  $region18: #{_lambda_.23} parent=0 // pred_check
    _
  $region19: #{_lambda_.23} parent=0 // pred_check_branch
    %21 = sbr.rel (0) target = $region21
  $region20: #{_lambda_.23} parent=0 // pred_region
    _
  $region21: #{_lambda_.23} parent=0 // pred_fallthru
    _
  %v23 = vld [vmem:[%s0] sm:$0x1]
  %v24 = vld [vmem:[%s1] sm:$0xf]
  %v25 = vld [vmem:[%s1 + $0x4] sm:$0xf]
  %v26 = vld [vmem:[%s1 + $0x8] sm:$0xf]
  %v27 = vld [vmem:[%s1 + $0xc] sm:$0xf]
  %v28 = vld [vmem:[%s2] sm:$0x1]
  %v30 = vlaneseq
  %v31 = vshrl.u32 %v30, 7
  %v32 = vsub.s32 0, %v31
  %v33 = vrot.slane %v28, %v32
  %v39 = vunpack.c.l.b16 %v24
  %v40 = vunpack.c.l.b16 %v25
  %v41 = vunpack.c.l.b16 %v26
  %v42 = vunpack.c.l.b16 %v27
  %v43 = vpack.c.b16 %v40, %v39
  %v44 = vpack.c.b16 %v42, %v41
  %vm47 = vcmask 261120
  %v49 = vsel %vm47, %v23, 0
  %51 = vmatprep.subr.bf16.mxu0 0
  %52 = vmatpush1.bf16.msra.mxu0 0
  %53 = vmatprep.subr.bf16.mxu0 0
  %54 = vmatpush1.bf16.msra.mxu0 0
  %55 = vmatprep.subr.bf16.mxu0 0
  %56 = vmatpush1.bf16.msra.mxu0 0
  %57 = vmatprep.subr.bf16.mxu0 0
  %58 = vmatpush1.bf16.msra.mxu0 0
  %59 = vmatprep.subr.bf16.mxu0 0
  %60 = vmatpush1.bf16.msra.mxu0 0
  %61 = vmatprep.subr.bf16.mxu0 0
  %62 = vmatpush1.bf16.msra.mxu0 0
  %63 = vmatprep.subr.bf16.mxu0 0
  %64 = vmatpush1.bf16.msra.mxu0 %v44
  %65 = vmatprep.subr.bf16.mxu0 0
  %66 = vmatpush1.bf16.msra.mxu0 %v43
  %67 = vmatprep.subr.bf16.mxu0 0
  %68 = vmatpush2.bf16.msra.mxu0 0
  %69 = vmatprep.subr.bf16.mxu0 0
  %70 = vmatpush2.bf16.msra.mxu0 0
  %71 = vmatprep.subr.bf16.mxu0 0
  %72 = vmatpush2.bf16.msra.mxu0 0
  %73 = vmatprep.subr.bf16.mxu0 0
  %74 = vmatpush2.bf16.msra.mxu0 0
  %75 = vmatprep.subr.bf16.mxu0 0
  %76 = vmatpush2.bf16.msra.mxu0 0
  %77 = vmatprep.subr.bf16.mxu0 0
  %78 = vmatpush2.bf16.msra.mxu0 0
  %79 = vmatprep.subr.bf16.mxu0 0
  %80 = vmatpush2.bf16.msra.mxu0 0
  %81 = vmatprep.subr.bf16.mxu0 0
  %82 = vmatpush2.bf16.msra.mxu0 0
  %83 = vmatprep.mubr.bf16.mxu0 0
  %84 = vmatmul.mubr.bf16.gmra.mxu0 %v49
  %v85 = vpop.f32.mrf.mxu0
  %v86 = vadd.f32 %v33, %v85
  %v87 = vpop.f32.mrf.mxu0
  %v88 = vpop.f32.mrf.mxu0
  %v89 = vpop.f32.mrf.mxu0
  %90 = vdwg.mxu0
  %v91 = vtanh.pop %v86
  %v92 = vld [vmem:[%s3] sm:$0x1]
  %v93 = vunpack.c.l.bf16 %v92
  %v94 = vlaneseq
  %v95 = vshrl.u32 %v94, 7
  %v96 = vsub.s32 0, %v95
  %v97 = vrot.slane %v93, %v96
  %v98 = vmul.f32 %v91, %v97
  %vm99 = vcmask 254976
  %v100 = vsel %vm99, %v98, 0.0
  %101 = vadd.xlane.f32.xlu0 %v100
  %v102 = vpop.xlane.xlu0 %101
  %v103 = vld [vmem:[#allocation2] sm:$0x1]
  %v105 = vlaneseq
  %v106 = vshrl.u32 %v105, 7
  %v107 = vsub.s32 0, %v106
  %v108 = vrot.slane %v103, %v107
  %v110 = vadd.f32 %v102, %v108
  %vm111 = vcmask 1024
  %112 = vst.msk [vmem:[%s5] sm:$0x3] %vm111, %v110
  // Predicated region
  $region22: #{_lambda_.23} parent=0 // pred_check
    _
  $region23: #{_lambda_.23} parent=0 // pred_check_branch
    %114 = sbr.rel (0) target = $region25
  $region24: #{_lambda_.23} parent=0 // pred_region
    _
  $region25: #{_lambda_.23} parent=0 // pred_fallthru
    _
  // Predicated region
  $region26: #{_lambda_.23} parent=0 // pred_check
    _
  $region27: #{_lambda_.23} parent=0 // pred_check_branch
    %116 = sbr.rel (0) target = $region29
  $region28: #{_lambda_.23} parent=0 // pred_region
    _
  $region29: #{_lambda_.23} parent=0 // pred_fallthru
    _

</llo_original>
